<compile_context>
chip_gen: v5e
topology: v5e:2x2
jax: 0.10.0
libtpu: 0.0.40
codegen_flags: <defaults>
</compile_context>

<pallas_src>
import functools

import jax
import jax.numpy as jnp
import numpy as np
from jax import lax
from jax.experimental import pallas as pl
from jax.experimental.pallas import tpu as pltpu

_EPS = 1e-5  # PyTorch BatchNorm2d default eps


# --------------------------- fused InvertResidual kernel ---------------------------
def _fused_kernel(x_ref, w1_ref, sh1_ref, wd_ref, sh2_ref, w3_ref, sh3_ref,
                  o_ref, h1s_ref, *, stride, tho, H, W, Wp_pad, use_res):
    # x_ref  : (Hp, Wp_pad, Cin)      padded input image (batch squeezed), width
    #                                 right-padded to a multiple of 8 (never read past W+1)
    # w1_ref : (Cin, Cmid)  bf16      1x1 expand weights, BN1 scale folded in
    # wd_ref : (9, Cmid)    f32       3x3 depthwise weights (kh*3+kw), BN2 scale folded in
    # w3_ref : (Cmid, Cout) bf16      1x1 project weights, BN3 scale folded in
    # sh*_ref: (1, C)       f32       folded BN shifts (conv bias folded into sh3)
    # o_ref  : (tho, Wo, Cout)        one tile of output rows
    # h1s_ref: (rows_in, Wp_pad, Cmid) VMEM scratch holding the expanded activation tile
    Wo = (W + 2 - 3) // stride + 1
    rows_in = (tho - 1) * stride + 3
    Cmid = w1_ref.shape[1]
    Cout = w3_ref.shape[1]

    row_step = tho * stride
    r = pl.program_id(1)
    p_start = pl.multiple_of(r * row_step, row_step)   # first padded row of this tile's window

    # ---- stage 1: 1x1 expansion (BN scale folded into w1) + ReLU6 -> VMEM scratch
    # One batched MXU contraction + one full-tile scratch store.
    xwin = x_ref[pl.ds(p_start, rows_in)]                        # (rows_in, Wp_pad, Cin)
    x2d = xwin.reshape(rows_in * Wp_pad, xwin.shape[-1])         # free: Wp_pad % 8 == 0
    h = jnp.dot(x2d.astype(w1_ref.dtype), w1_ref[...],
                preferred_element_type=jnp.float32)              # (rows_in*Wp_pad, Cmid)
    h = jnp.clip(h + sh1_ref[...], 0.0, 6.0)
    h1s_ref[...] = h.reshape(rows_in, Wp_pad, Cmid)

    # The reference module zero-pads AFTER conv1 + BN + ReLU6, so the depthwise
    # conv must see zeros on the one-pixel border: overwrite the scratch border
    # rows/cols with a few tiny stores (no full-tile select).
    zcol = jnp.zeros((rows_in, 1, Cmid), jnp.float32)
    h1s_ref[:, pl.ds(0, 1), :] = zcol                            # left pad column
    h1s_ref[:, pl.ds(W + 1, 1), :] = zcol                        # right pad column
    zrow = jnp.zeros((1, Wp_pad, Cmid), jnp.float32)

    @pl.when(p_start == 0)
    def _():                                                     # top pad row (first tile only)
        h1s_ref[pl.ds(0, 1)] = zrow

    @pl.when(p_start + rows_in - 1 == H + 1)
    def _():                                                     # bottom pad row (last tile only)
        h1s_ref[pl.ds(rows_in - 1, 1)] = zrow

    # ---- stage 2: 3x3 depthwise conv (BN scale folded into wd) + ReLU6 (f32 VPU work)
    wd = wd_ref[...]                                             # (9, Cmid)
    acc = jnp.zeros((tho, Wo, Cmid), jnp.float32)
    if stride == 1:
        # Each tap is a contiguous view of the scratch ref; only the accumulator
        # and one tap are live at a time.
        for kh in range(3):
            for kw in range(3):
                tap = h1s_ref[pl.ds(kh, tho), pl.ds(kw, Wo), :]
                acc = acc + tap * wd[3 * kh + kw]
    else:  # stride == 2: one contiguous row-window load per kh, then cheap strided slices
        nrows = (tho - 1) * stride + 1
        ncols = (Wo - 1) * stride + 1
        for kh in range(3):
            rows = h1s_ref[pl.ds(kh, nrows)]                     # (nrows, Wp_pad, Cmid)
            rows = lax.slice(rows, (0, 0, 0), (nrows, Wp_pad, Cmid),
                             (stride, 1, 1))                     # (tho, Wp_pad, Cmid)
            for kw in range(3):
                tap = lax.slice(rows, (0, kw, 0), (tho, kw + ncols, Cmid),
                                (1, stride, 1))                  # (tho, Wo, Cmid)
                acc = acc + tap * wd[3 * kh + kw]
    h2 = jnp.clip(acc + sh2_ref[...], 0.0, 6.0)                  # (tho, Wo, Cmid)

    # ---- stage 3: 1x1 projection (conv bias + BN folded into sh3) (+ residual)
    # One MXU matmul with M = tho*Wo and a single full-tile output store.
    h2d = h2.reshape(tho * Wo, Cmid)                             # free when Wo % 8 == 0
    y = jnp.dot(h2d.astype(w3_ref.dtype), w3_ref[...],
                preferred_element_type=jnp.float32) + sh3_ref[...]
    y = y.reshape(tho, Wo, Cout)
    if use_res:
        y = y + x_ref[pl.ds(p_start + 1, tho), pl.ds(1, W), :]   # residual (Cin == Cout)
    o_ref[...] = y.astype(o_ref.dtype)


def _choose_row_tile(Ho, Wo, Wp_pad, Cmid, stride, row_tile=None,
                     vmem_budget_bytes=8 * 1024 * 1024):
    """Output rows per grid step: a divisor of Ho with MXU-friendly M = tho*Wo and a
    scratch + accumulator working set bounded by a per-step VMEM budget."""
    lanes = max(Cmid, 128)                 # VMEM lane padding for narrow channel counts

    def fits(d):
        rows_in = (d - 1) * stride + 3
        scratch = rows_in * Wp_pad * lanes * 4
        live = 2 * d * Wo * lanes * 4      # rough accumulator + h2 working set
        return scratch + live <= vmem_budget_bytes

    divisors = [d for d in range(1, Ho + 1) if Ho % d == 0]
    if row_tile is not None:
        cands = [d for d in divisors if d <= row_tile and fits(d)]
        return max(cands) if cands else 1
    # TODO(synk): handle a ragged last row-tile (prime Ho) with pl.when masking
    # instead of collapsing to tiny tiles.
    good = [d for d in divisors if d * Wo >= 128 and fits(d)]
    if good:
        return min(good)
    cands = [d for d in divisors if fits(d)]
    return max(cands) if cands else 1


def invert_residual_forward(x_nchw, params, *, stride, t=6, row_tile=None):
    """Forward pass of InvertResidual. Input/output are NCHW (PyTorch convention)."""
    N, Cin, H, W = x_nchw.shape
    Cmid = Cin * t
    Cout = params["w3"].shape[0]
    Hp, Wp = H + 2, W + 2
    Wp_pad = ((Wp + 7) // 8) * 8           # right-pad width so in-kernel reshapes are free
    Ho = (H + 2 - 3) // stride + 1
    Wo = (W + 2 - 3) // stride + 1

    x = jnp.transpose(x_nchw, (0, 2, 3, 1)).astype(jnp.float32)            # NHWC
    # Pad only the SMALL (Cin-channel) input; the expanded tensor is never padded
    # in HBM (its padding semantics are handled by the in-kernel border stores).
    x_pad = jnp.pad(x, ((0, 0), (1, 1), (1, 1 + Wp_pad - Wp), (0, 0)))

    # Fold BN scales into the conv weights; only "+ shift" remains in the kernel.
    # The two 1x1 (MXU) weight matrices are cast to bf16 once here; the kernel
    # accumulates in f32 (preferred_element_type).
    g1, be1, m1, v1 = params["bn1"]
    s1 = g1 / jnp.sqrt(v1 + _EPS)
    sh1 = (be1 - m1 * s1).reshape(1, Cmid)
    w1f = (params["w1"][:, :, 0, 0].T * s1[None, :]).astype(jnp.bfloat16)  # (Cin, Cmid)

    g2, be2, m2, v2 = params["bn2"]
    s2 = g2 / jnp.sqrt(v2 + _EPS)
    sh2 = (be2 - m2 * s2).reshape(1, Cmid)
    wdf = (jnp.transpose(params["wd"][:, 0, :, :], (1, 2, 0)) * s2[None, None, :]
           ).reshape(9, Cmid)                                              # (9, Cmid) f32

    g3, be3, m3, v3 = params["bn3"]
    s3 = g3 / jnp.sqrt(v3 + _EPS)
    sh3 = (be3 + (params["b3"] - m3) * s3).reshape(1, Cout)                # conv bias folded
    w3f = (params["w3"][:, :, 0, 0].T * s3[None, :]).astype(jnp.bfloat16)  # (Cmid, Cout)

    tho = _choose_row_tile(Ho, Wo, Wp_pad, Cmid, stride, row_tile)
    rows_in = (tho - 1) * stride + 3
    use_res = (stride == 1) and (Cin == Cout)

    kernel = functools.partial(_fused_kernel, stride=stride, tho=tho, H=H, W=W,
                               Wp_pad=Wp_pad, use_res=use_res)

    out = pl.pallas_call(
        kernel,
        out_shape=jax.ShapeDtypeStruct((N, Ho, Wo, Cout), jnp.float32),
        grid=(N, Ho // tho),
        in_specs=[
            # Whole padded image per batch element (small, Cin channels). The
            # index_map ignores r and the row-tile axis is innermost, so the block
            # is DMA'd only once per image.
            # TODO(synk): for large images on v7x (64 MiB VMEM) switch to a
            # rows_in-row window block with manual halo DMA.
            pl.BlockSpec((None, Hp, Wp_pad, Cin), lambda n, r: (n, 0, 0, 0)),
            pl.BlockSpec((Cin, Cmid), lambda n, r: (0, 0)),
            pl.BlockSpec((1, Cmid), lambda n, r: (0, 0)),
            pl.BlockSpec((9, Cmid), lambda n, r: (0, 0)),
            pl.BlockSpec((1, Cmid), lambda n, r: (0, 0)),
            pl.BlockSpec((Cmid, Cout), lambda n, r: (0, 0)),
            pl.BlockSpec((1, Cout), lambda n, r: (0, 0)),
        ],
        out_specs=pl.BlockSpec((None, tho, Wo, Cout), lambda n, r: (n, r, 0, 0)),
        scratch_shapes=[pltpu.VMEM((rows_in, Wp_pad, Cmid), jnp.float32)],
        compiler_params=pltpu.CompilerParams(
            # Shard the batch axis across TensorCores (2 on v7x); keep the row-tile
            # axis sequential so the shared image block is not re-fetched.
            dimension_semantics=("parallel", "arbitrary"),
            vmem_limit_bytes=32 * 1024 * 1024,
        ),
    )(x_pad, w1f, sh1, wdf, sh2, w3f, sh3)

    return jnp.transpose(out, (0, 3, 1, 2))  # back to NCHW


# --------------------------- pure-JAX (XLA) reference ----------------------------
def reference_forward(x, params, *, stride):
    def bn(y, p):
        g, b, m, v = p
        inv = g / jnp.sqrt(v + _EPS)
        return (y - m[None, :, None, None]) * inv[None, :, None, None] + b[None, :, None, None]

    Cmid = params["w1"].shape[0]
    dn = ("NCHW", "OIHW", "NCHW")
    y = lax.conv_general_dilated(x, params["w1"], (1, 1), "VALID", dimension_numbers=dn)
    y = jnp.clip(bn(y, params["bn1"]), 0.0, 6.0)
    y = lax.conv_general_dilated(
        y, params["wd"], (stride, stride), ((1, 1), (1, 1)),
        dimension_numbers=dn, feature_group_count=Cmid)
    y = jnp.clip(bn(y, params["bn2"]), 0.0, 6.0)
    y = lax.conv_general_dilated(y, params["w3"], (1, 1), "VALID", dimension_numbers=dn)
    y = y + params["b3"][None, :, None, None]
    y = bn(y, params["bn3"])
    if stride == 1 and x.shape[1] == params["w3"].shape[0]:
        y = y + x
    return y


def make_params(key, Cin, Cout, t):
    Cmid = Cin * t
    ks = jax.random.split(key, 7)

    def bn_params(k, C):
        k1, k2, k3, k4 = jax.random.split(k, 4)
        gamma = jax.random.uniform(k1, (C,), jnp.float32, 0.5, 1.5)
        beta = jax.random.normal(k2, (C,), jnp.float32) * 0.1
        mean = jax.random.normal(k3, (C,), jnp.float32) * 0.1
        var = jax.random.uniform(k4, (C,), jnp.float32, 0.5, 1.5)
        return (gamma, beta, mean, var)

    return {
        "w1": jax.random.normal(ks[0], (Cmid, Cin, 1, 1), jnp.float32) * 0.2,
        "bn1": bn_params(ks[1], Cmid),
        "wd": jax.random.normal(ks[2], (Cmid, 1, 3, 3), jnp.float32) * 0.2,
        "bn2": bn_params(ks[3], Cmid),
        "w3": jax.random.normal(ks[4], (Cout, Cmid, 1, 1), jnp.float32) * 0.2,
        "b3": jax.random.normal(ks[5], (Cout,), jnp.float32) * 0.1,
        "bn3": bn_params(ks[6], Cout),
    }


if __name__ == "__main__":
    key = jax.random.PRNGKey(0)
    k_x, k_p = jax.random.split(key)

    N, Cin, H, W = 2, 4, 16, 16
    t = 6
    x = jax.random.normal(k_x, (N, Cin, H, W), jnp.float32)

    # Tolerance is loosened vs. the all-f32 version because the two 1x1 convs use
    # bf16 MXU operands (f32 accumulation).

    # Config 1: stride=1, Cout==Cin -> residual path; contiguous ref-view taps.
    params1 = make_params(k_p, Cin, Cin, t)
    fwd1 = jax.jit(functools.partial(invert_residual_forward, stride=1, t=t))
    out1 = jax.block_until_ready(fwd1(x, params1))
    ref1 = jax.block_until_ready(reference_forward(x, params1, stride=1))
    assert out1.shape == ref1.shape, (out1.shape, ref1.shape)
    np.testing.assert_allclose(np.asarray(out1), np.asarray(ref1), rtol=2e-2, atol=2e-2)

    # Config 2: stride=2, Cout != Cin -> no residual; strided depthwise path.
    params2 = make_params(jax.random.fold_in(k_p, 1), Cin, 8, t)
    fwd2 = jax.jit(functools.partial(invert_residual_forward, stride=2, t=t))
    out2 = jax.block_until_ready(fwd2(x, params2))
    ref2 = jax.block_until_ready(reference_forward(x, params2, stride=2))
    assert out2.shape == ref2.shape, (out2.shape, ref2.shape)
    np.testing.assert_allclose(np.asarray(out2), np.asarray(ref2), rtol=2e-2, atol=2e-2)

    print("KERNEL_OK")
</pallas_src>

<mosaic_0001>
module attributes {stable_mosaic.version = 11 : i64} {
  func.func @_fused_kernel(%arg0: i32, %arg1: i32, %arg2: memref<1x18x24x4xf32, #tpu.memory_space<vmem>>, %arg3: memref<4x24xbf16, #tpu.memory_space<vmem>>, %arg4: memref<1x24xf32, #tpu.memory_space<vmem>>, %arg5: memref<9x24xf32, #tpu.memory_space<vmem>>, %arg6: memref<1x24xf32, #tpu.memory_space<vmem>>, %arg7: memref<24x4xbf16, #tpu.memory_space<vmem>>, %arg8: memref<1x4xf32, #tpu.memory_space<vmem>>, %arg9: memref<1x8x16x4xf32, #tpu.memory_space<vmem>>, %arg10: memref<10x24x24xf32, #tpu.memory_space<vmem>>) attributes {dimension_semantics = [#tpu.dimension_semantics<parallel>, #tpu.dimension_semantics<arbitrary>], iteration_bounds = array<i64: 2, 2>, scalar_prefetch = 0 : i64, scratch_operands = 1 : i64, tpu.core_type = #tpu.core_type<tc>, window_params = [{transform_indices = @transform_0, window_bounds = array<i64: 1, 18, 24, 4>}, {pipeline_mode = #tpu.pipeline_mode<synchronous>, transform_indices = @transform_1, window_bounds = array<i64: 4, 24>}, {pipeline_mode = #tpu.pipeline_mode<synchronous>, transform_indices = @transform_2, window_bounds = array<i64: 1, 24>}, {pipeline_mode = #tpu.pipeline_mode<synchronous>, transform_indices = @transform_3, window_bounds = array<i64: 9, 24>}, {pipeline_mode = #tpu.pipeline_mode<synchronous>, transform_indices = @transform_4, window_bounds = array<i64: 1, 24>}, {pipeline_mode = #tpu.pipeline_mode<synchronous>, transform_indices = @transform_5, window_bounds = array<i64: 24, 4>}, {pipeline_mode = #tpu.pipeline_mode<synchronous>, transform_indices = @transform_6, window_bounds = array<i64: 1, 4>}, {transform_indices = @transform_7, window_bounds = array<i64: 1, 8, 16, 4>}]} {
    %c8_i32 = arith.constant 8 : i32
    %0 = arith.muli %arg1, %c8_i32 : i32
    %1 = tpu.assume_multiple %0, 8 : i32
    %c0 = arith.constant 0 : index
    %2 = arith.index_cast %1 : i32 to index
    %c0_0 = arith.constant 0 : index
    %c0_1 = arith.constant 0 : index
    %3 = vector.load %arg2[%c0, %2, %c0_0, %c0_1] : memref<1x18x24x4xf32, #tpu.memory_space<vmem>>, vector<1x10x24x4xf32>
    %4 = vector.shape_cast %3 : vector<1x10x24x4xf32> to vector<10x24x4xf32>
    %5 = vector.shape_cast %4 : vector<10x24x4xf32> to vector<240x4xf32>
    %6 = arith.truncf %5 : vector<240x4xf32> to vector<240x4xbf16>
    %c0_2 = arith.constant 0 : index
    %c0_3 = arith.constant 0 : index
    %7 = vector.load %arg3[%c0_2, %c0_3] : memref<4x24xbf16, #tpu.memory_space<vmem>>, vector<4x24xbf16>
    %cst = arith.constant dense<0.000000e+00> : vector<240x24xf32>
    %8 = tpu.matmul %6, %7, %cst {dimension_numbers = #tpu.dot_dimension_numbers<[1], [0], [0], [1], [0, 0, 1, 1], [], []>} : vector<240x4xbf16>, vector<4x24xbf16>, vector<240x24xf32> -> vector<240x24xf32>
    %c0_4 = arith.constant 0 : index
    %c0_5 = arith.constant 0 : index
    %9 = vector.load %arg4[%c0_4, %c0_5] : memref<1x24xf32, #tpu.memory_space<vmem>>, vector<1x24xf32>
    %10 = vector.broadcast %9 : vector<1x24xf32> to vector<240x24xf32>
    %11 = arith.addf %8, %10 : vector<240x24xf32>
    %cst_6 = arith.constant 0.000000e+00 : f32
    %cst_7 = arith.constant 6.000000e+00 : f32
    %12 = vector.broadcast %cst_6 : f32 to vector<240x24xf32>
    %13 = arith.maximumf %12, %11 : vector<240x24xf32>
    %14 = vector.broadcast %cst_7 : f32 to vector<240x24xf32>
    %15 = arith.minimumf %14, %13 : vector<240x24xf32>
    %16 = vector.shape_cast %15 : vector<240x24xf32> to vector<10x24x24xf32>
    %c0_8 = arith.constant 0 : index
    %c0_9 = arith.constant 0 : index
    %c0_10 = arith.constant 0 : index
    %17 = vector.load %arg10[%c0_8, %c0_9, %c0_10] : memref<10x24x24xf32, #tpu.memory_space<vmem>>, vector<10x24x24xf32>
    tpu.vector_store %arg10[%c0_8, %c0_9, %c0_10], %16 {strides = array<i32>} : memref<10x24x24xf32, #tpu.memory_space<vmem>>, vector<10x24x24xf32>,
    %cst_11 = arith.constant 0.000000e+00 : f32
    %18 = vector.broadcast %cst_11 : f32 to vector<10x1x24xf32>
    %c0_12 = arith.constant 0 : index
    %c0_13 = arith.constant 0 : index
    %c0_14 = arith.constant 0 : index
    %19 = vector.load %arg10[%c0_12, %c0_13, %c0_14] : memref<10x24x24xf32, #tpu.memory_space<vmem>>, vector<10x1x24xf32>
    tpu.vector_store %arg10[%c0_12, %c0_13, %c0_14], %18 {strides = array<i32>} : memref<10x24x24xf32, #tpu.memory_space<vmem>>, vector<10x1x24xf32>,
    %c0_15 = arith.constant 0 : index
    %c17 = arith.constant 17 : index
    %c0_16 = arith.constant 0 : index
    %20 = vector.load %arg10[%c0_15, %c17, %c0_16] : memref<10x24x24xf32, #tpu.memory_space<vmem>>, vector<10x1x24xf32>
    tpu.vector_store %arg10[%c0_15, %c17, %c0_16], %18 {strides = array<i32>} : memref<10x24x24xf32, #tpu.memory_space<vmem>>, vector<10x1x24xf32>,
    %cst_17 = arith.constant 0.000000e+00 : f32
    %21 = vector.broadcast %cst_17 : f32 to vector<1x24x24xf32>
    %c0_i32 = arith.constant 0 : i32
    %22 = arith.cmpi eq, %1, %c0_i32 : i32
    %23 = arith.extui %22 : i1 to i32
    %c0_i32_18 = arith.constant 0 : i32
    %24 = arith.cmpi ne, %23, %c0_i32_18 : i32
    scf.if %24 {
      %c0_65 = arith.constant 0 : index
      %c0_66 = arith.constant 0 : index
      %c0_67 = arith.constant 0 : index
      %119 = vector.load %arg10[%c0_65, %c0_66, %c0_67] : memref<10x24x24xf32, #tpu.memory_space<vmem>>, vector<1x24x24xf32>
      tpu.vector_store %arg10[%c0_65, %c0_66, %c0_67], %21 {strides = array<i32>} : memref<10x24x24xf32, #tpu.memory_space<vmem>>, vector<1x24x24xf32>,
    } else {
    }
    %c10_i32 = arith.constant 10 : i32
    %25 = arith.addi %1, %c10_i32 : i32
    %c1_i32 = arith.constant 1 : i32
    %26 = arith.subi %25, %c1_i32 : i32
    %c17_i32 = arith.constant 17 : i32
    %27 = arith.cmpi eq, %26, %c17_i32 : i32
    %28 = arith.extui %27 : i1 to i32
    %c0_i32_19 = arith.constant 0 : i32
    %29 = arith.cmpi ne, %28, %c0_i32_19 : i32
    scf.if %29 {
      %c9 = arith.constant 9 : index
      %c0_65 = arith.constant 0 : index
      %c0_66 = arith.constant 0 : index
      %119 = vector.load %arg10[%c9, %c0_65, %c0_66] : memref<10x24x24xf32, #tpu.memory_space<vmem>>, vector<1x24x24xf32>
      tpu.vector_store %arg10[%c9, %c0_65, %c0_66], %21 {strides = array<i32>} : memref<10x24x24xf32, #tpu.memory_space<vmem>>, vector<1x24x24xf32>,
    } else {
    }
    %c0_20 = arith.constant 0 : index
    %c0_21 = arith.constant 0 : index
    %30 = vector.load %arg5[%c0_20, %c0_21] : memref<9x24xf32, #tpu.memory_space<vmem>>, vector<9x24xf32>
    %cst_22 = arith.constant 0.000000e+00 : f32
    %31 = vector.broadcast %cst_22 : f32 to vector<8x16x24xf32>
    %c0_23 = arith.constant 0 : index
    %c0_24 = arith.constant 0 : index
    %c0_25 = arith.constant 0 : index
    %32 = vector.load %arg10[%c0_23, %c0_24, %c0_25] : memref<10x24x24xf32, #tpu.memory_space<vmem>>, vector<8x16x24xf32>
    %33 = vector.extract_strided_slice %30 {offsets = [0, 0], sizes = [1, 24], strides = [1, 1]} : vector<9x24xf32> to vector<1x24xf32>
    %34 = vector.shape_cast %33 : vector<1x24xf32> to vector<24xf32>
    %35 = vector.shape_cast %34 : vector<24xf32> to vector<1x1x24xf32>
    %36 = vector.broadcast %35 : vector<1x1x24xf32> to vector<8x16x24xf32>
    %37 = arith.mulf %32, %36 : vector<8x16x24xf32>
    %38 = arith.addf %31, %37 : vector<8x16x24xf32>
    %c0_26 = arith.constant 0 : index
    %c1 = arith.constant 1 : index
    %c0_27 = arith.constant 0 : index
    %39 = vector.load %arg10[%c0_26, %c1, %c0_27] : memref<10x24x24xf32, #tpu.memory_space<vmem>>, vector<8x16x24xf32>
    %40 = vector.extract_strided_slice %30 {offsets = [1, 0], sizes = [1, 24], strides = [1, 1]} : vector<9x24xf32> to vector<1x24xf32>
    %41 = vector.shape_cast %40 : vector<1x24xf32> to vector<24xf32>
    %42 = vector.shape_cast %41 : vector<24xf32> to vector<1x1x24xf32>
    %43 = vector.broadcast %42 : vector<1x1x24xf32> to vector<8x16x24xf32>
    %44 = arith.mulf %39, %43 : vector<8x16x24xf32>
    %45 = arith.addf %38, %44 : vector<8x16x24xf32>
    %c0_28 = arith.constant 0 : index
    %c2 = arith.constant 2 : index
    %c0_29 = arith.constant 0 : index
    %46 = vector.load %arg10[%c0_28, %c2, %c0_29] : memref<10x24x24xf32, #tpu.memory_space<vmem>>, vector<8x16x24xf32>
    %47 = vector.extract_strided_slice %30 {offsets = [2, 0], sizes = [1, 24], strides = [1, 1]} : vector<9x24xf32> to vector<1x24xf32>
    %48 = vector.shape_cast %47 : vector<1x24xf32> to vector<24xf32>
    %49 = vector.shape_cast %48 : vector<24xf32> to vector<1x1x24xf32>
    %50 = vector.broadcast %49 : vector<1x1x24xf32> to vector<8x16x24xf32>
    %51 = arith.mulf %46, %50 : vector<8x16x24xf32>
    %52 = arith.addf %45, %51 : vector<8x16x24xf32>
    %c1_30 = arith.constant 1 : index
    %c0_31 = arith.constant 0 : index
    %c0_32 = arith.constant 0 : index
    %53 = vector.load %arg10[%c1_30, %c0_31, %c0_32] : memref<10x24x24xf32, #tpu.memory_space<vmem>>, vector<8x16x24xf32>
    %54 = vector.extract_strided_slice %30 {offsets = [3, 0], sizes = [1, 24], strides = [1, 1]} : vector<9x24xf32> to vector<1x24xf32>
    %55 = vector.shape_cast %54 : vector<1x24xf32> to vector<24xf32>
    %56 = vector.shape_cast %55 : vector<24xf32> to vector<1x1x24xf32>
    %57 = vector.broadcast %56 : vector<1x1x24xf32> to vector<8x16x24xf32>
    %58 = arith.mulf %53, %57 : vector<8x16x24xf32>
    %59 = arith.addf %52, %58 : vector<8x16x24xf32>
    %c1_33 = arith.constant 1 : index
    %c1_34 = arith.constant 1 : index
    %c0_35 = arith.constant 0 : index
    %60 = vector.load %arg10[%c1_33, %c1_34, %c0_35] : memref<10x24x24xf32, #tpu.memory_space<vmem>>, vector<8x16x24xf32>
    %61 = vector.extract_strided_slice %30 {offsets = [4, 0], sizes = [1, 24], strides = [1, 1]} : vector<9x24xf32> to vector<1x24xf32>
    %62 = vector.shape_cast %61 : vector<1x24xf32> to vector<24xf32>
    %63 = vector.shape_cast %62 : vector<24xf32> to vector<1x1x24xf32>
    %64 = vector.broadcast %63 : vector<1x1x24xf32> to vector<8x16x24xf32>
    %65 = arith.mulf %60, %64 : vector<8x16x24xf32>
    %66 = arith.addf %59, %65 : vector<8x16x24xf32>
    %c1_36 = arith.constant 1 : index
    %c2_37 = arith.constant 2 : index
    %c0_38 = arith.constant 0 : index
    %67 = vector.load %arg10[%c1_36, %c2_37, %c0_38] : memref<10x24x24xf32, #tpu.memory_space<vmem>>, vector<8x16x24xf32>
    %68 = vector.extract_strided_slice %30 {offsets = [5, 0], sizes = [1, 24], strides = [1, 1]} : vector<9x24xf32> to vector<1x24xf32>
    %69 = vector.shape_cast %68 : vector<1x24xf32> to vector<24xf32>
    %70 = vector.shape_cast %69 : vector<24xf32> to vector<1x1x24xf32>
    %71 = vector.broadcast %70 : vector<1x1x24xf32> to vector<8x16x24xf32>
    %72 = arith.mulf %67, %71 : vector<8x16x24xf32>
    %73 = arith.addf %66, %72 : vector<8x16x24xf32>
    %c2_39 = arith.constant 2 : index
    %c0_40 = arith.constant 0 : index
    %c0_41 = arith.constant 0 : index
    %74 = vector.load %arg10[%c2_39, %c0_40, %c0_41] : memref<10x24x24xf32, #tpu.memory_space<vmem>>, vector<8x16x24xf32>
    %75 = vector.extract_strided_slice %30 {offsets = [6, 0], sizes = [1, 24], strides = [1, 1]} : vector<9x24xf32> to vector<1x24xf32>
    %76 = vector.shape_cast %75 : vector<1x24xf32> to vector<24xf32>
    %77 = vector.shape_cast %76 : vector<24xf32> to vector<1x1x24xf32>
    %78 = vector.broadcast %77 : vector<1x1x24xf32> to vector<8x16x24xf32>
    %79 = arith.mulf %74, %78 : vector<8x16x24xf32>
    %80 = arith.addf %73, %79 : vector<8x16x24xf32>
    %c2_42 = arith.constant 2 : index
    %c1_43 = arith.constant 1 : index
    %c0_44 = arith.constant 0 : index
    %81 = vector.load %arg10[%c2_42, %c1_43, %c0_44] : memref<10x24x24xf32, #tpu.memory_space<vmem>>, vector<8x16x24xf32>
    %82 = vector.extract_strided_slice %30 {offsets = [7, 0], sizes = [1, 24], strides = [1, 1]} : vector<9x24xf32> to vector<1x24xf32>
    %83 = vector.shape_cast %82 : vector<1x24xf32> to vector<24xf32>
    %84 = vector.shape_cast %83 : vector<24xf32> to vector<1x1x24xf32>
    %85 = vector.broadcast %84 : vector<1x1x24xf32> to vector<8x16x24xf32>
    %86 = arith.mulf %81, %85 : vector<8x16x24xf32>
    %87 = arith.addf %80, %86 : vector<8x16x24xf32>
    %c2_45 = arith.constant 2 : index
    %c2_46 = arith.constant 2 : index
    %c0_47 = arith.constant 0 : index
    %88 = vector.load %arg10[%c2_45, %c2_46, %c0_47] : memref<10x24x24xf32, #tpu.memory_space<vmem>>, vector<8x16x24xf32>
    %89 = vector.extract_strided_slice %30 {offsets = [8, 0], sizes = [1, 24], strides = [1, 1]} : vector<9x24xf32> to vector<1x24xf32>
    %90 = vector.shape_cast %89 : vector<1x24xf32> to vector<24xf32>
    %91 = vector.shape_cast %90 : vector<24xf32> to vector<1x1x24xf32>
    %92 = vector.broadcast %91 : vector<1x1x24xf32> to vector<8x16x24xf32>
    %93 = arith.mulf %88, %92 : vector<8x16x24xf32>
    %94 = arith.addf %87, %93 : vector<8x16x24xf32>
    %c0_48 = arith.constant 0 : index
    %c0_49 = arith.constant 0 : index
    %95 = vector.load %arg6[%c0_48, %c0_49] : memref<1x24xf32, #tpu.memory_space<vmem>>, vector<1x24xf32>
    %96 = vector.shape_cast %95 : vector<1x24xf32> to vector<1x1x24xf32>
    %97 = vector.broadcast %96 : vector<1x1x24xf32> to vector<8x16x24xf32>
    %98 = arith.addf %94, %97 : vector<8x16x24xf32>
    %cst_50 = arith.constant 0.000000e+00 : f32
    %cst_51 = arith.constant 6.000000e+00 : f32
    %99 = vector.broadcast %cst_50 : f32 to vector<8x16x24xf32>
    %100 = arith.maximumf %99, %98 : vector<8x16x24xf32>
    %101 = vector.broadcast %cst_51 : f32 to vector<8x16x24xf32>
    %102 = arith.minimumf %101, %100 : vector<8x16x24xf32>
    %103 = vector.shape_cast %102 : vector<8x16x24xf32> to vector<128x24xf32>
    %104 = arith.truncf %103 : vector<128x24xf32> to vector<128x24xbf16>
    %c0_52 = arith.constant 0 : index
    %c0_53 = arith.constant 0 : index
    %105 = vector.load %arg7[%c0_52, %c0_53] : memref<24x4xbf16, #tpu.memory_space<vmem>>, vector<24x4xbf16>
    %cst_54 = arith.constant dense<0.000000e+00> : vector<128x4xf32>
    %106 = tpu.matmul %104, %105, %cst_54 {dimension_numbers = #tpu.dot_dimension_numbers<[1], [0], [0], [1], [0, 0, 1, 1], [], []>} : vector<128x24xbf16>, vector<24x4xbf16>, vector<128x4xf32> -> vector<128x4xf32>
    %c0_55 = arith.constant 0 : index
    %c0_56 = arith.constant 0 : index
    %107 = vector.load %arg8[%c0_55, %c0_56] : memref<1x4xf32, #tpu.memory_space<vmem>>, vector<1x4xf32>
    %108 = vector.broadcast %107 : vector<1x4xf32> to vector<128x4xf32>
    %109 = arith.addf %106, %108 : vector<128x4xf32>
    %110 = vector.shape_cast %109 : vector<128x4xf32> to vector<8x16x4xf32>
    %c1_i32_57 = arith.constant 1 : i32
    %111 = arith.addi %1, %c1_i32_57 : i32
    %c0_58 = arith.constant 0 : index
    %112 = arith.index_cast %111 : i32 to index
    %c1_59 = arith.constant 1 : index
    %c0_60 = arith.constant 0 : index
    %113 = vector.load %arg2[%c0_58, %112, %c1_59, %c0_60] : memref<1x18x24x4xf32, #tpu.memory_space<vmem>>, vector<1x8x16x4xf32>
    %114 = vector.shape_cast %113 : vector<1x8x16x4xf32> to vector<8x16x4xf32>
    %115 = arith.addf %110, %114 : vector<8x16x4xf32>
    %c0_61 = arith.constant 0 : index
    %c0_62 = arith.constant 0 : index
    %c0_63 = arith.constant 0 : index
    %c0_64 = arith.constant 0 : index
    %116 = vector.load %arg9[%c0_61, %c0_62, %c0_63, %c0_64] : memref<1x8x16x4xf32, #tpu.memory_space<vmem>>, vector<1x8x16x4xf32>
    %117 = vector.shape_cast %116 : vector<1x8x16x4xf32> to vector<8x16x4xf32>
    %118 = vector.shape_cast %115 : vector<8x16x4xf32> to vector<1x8x16x4xf32>
    tpu.vector_store %arg9[%c0_61, %c0_62, %c0_63, %c0_64], %118 {strides = array<i32>} : memref<1x8x16x4xf32, #tpu.memory_space<vmem>>, vector<1x8x16x4xf32>,
    return
  }
  func.func @transform_0(%arg0: i32, %arg1: i32) -> (i32, i32, i32, i32) {
    %c0_i32 = arith.constant 0 : i32
    %c0_i32_0 = arith.constant 0 : i32
    %c0_i32_1 = arith.constant 0 : i32
    %c0_i32_2 = arith.constant 0 : i32
    return %arg0, %c0_i32, %c0_i32_0, %c0_i32_1 : i32, i32, i32, i32
  }
  func.func @transform_1(%arg0: i32, %arg1: i32) -> (i32, i32) {
    %c0_i32 = arith.constant 0 : i32
    %c0_i32_0 = arith.constant 0 : i32
    %c0_i32_1 = arith.constant 0 : i32
    return %c0_i32, %c0_i32_0 : i32, i32
  }
  func.func @transform_2(%arg0: i32, %arg1: i32) -> (i32, i32) {
    %c0_i32 = arith.constant 0 : i32
    %c0_i32_0 = arith.constant 0 : i32
    %c0_i32_1 = arith.constant 0 : i32
    return %c0_i32, %c0_i32_0 : i32, i32
  }
  func.func @transform_3(%arg0: i32, %arg1: i32) -> (i32, i32) {
    %c0_i32 = arith.constant 0 : i32
    %c0_i32_0 = arith.constant 0 : i32
    %c0_i32_1 = arith.constant 0 : i32
    return %c0_i32, %c0_i32_0 : i32, i32
  }
  func.func @transform_4(%arg0: i32, %arg1: i32) -> (i32, i32) {
    %c0_i32 = arith.constant 0 : i32
    %c0_i32_0 = arith.constant 0 : i32
    %c0_i32_1 = arith.constant 0 : i32
    return %c0_i32, %c0_i32_0 : i32, i32
  }
  func.func @transform_5(%arg0: i32, %arg1: i32) -> (i32, i32) {
    %c0_i32 = arith.constant 0 : i32
    %c0_i32_0 = arith.constant 0 : i32
    %c0_i32_1 = arith.constant 0 : i32
    return %c0_i32, %c0_i32_0 : i32, i32
  }
  func.func @transform_6(%arg0: i32, %arg1: i32) -> (i32, i32) {
    %c0_i32 = arith.constant 0 : i32
    %c0_i32_0 = arith.constant 0 : i32
    %c0_i32_1 = arith.constant 0 : i32
    return %c0_i32, %c0_i32_0 : i32, i32
  }
  func.func @transform_7(%arg0: i32, %arg1: i32) -> (i32, i32, i32, i32) {
    %c0_i32 = arith.constant 0 : i32
    %c0_i32_0 = arith.constant 0 : i32
    %c0_i32_1 = arith.constant 0 : i32
    return %arg0, %arg1, %c0_i32, %c0_i32_0 : i32, i32, i32, i32
  }
}

</mosaic_0001>

<llo_original>
// kernel: invert_residual_forward.1
$region0: #{invert_residual_forward.1}
  #allocation0 [shape = 'u32[]', space=smem, size = 0x4, offset = 0x4, fixed_abs, tag = 'smem constant byte address 0x4 - core index']
  #allocation1 [shape = 'u32[72,128]{1,0:T(1,128)}', space=vmem, size = 0x9000, scoped, tag = 'internal scratch']
  #allocation2 [shape = 'f32[10,24,24]{2,1,0:T(8,128)}', space=vmem, size = 0x1e000, scoped, tag = 'scratch operand']
  %s0 = inlined_call_operand.vmem [shape: f32[2,18,24,4], index: 0, kind: input, shape index: {}]
  %s1 = inlined_call_operand.vmem [shape: bf16[4,24], index: 1, kind: input, shape index: {}]
  %s2 = inlined_call_operand.vmem [shape: f32[1,24], index: 2, kind: input, shape index: {}]
  %s3 = inlined_call_operand.vmem [shape: f32[9,24], index: 3, kind: input, shape index: {}]
  %s4 = inlined_call_operand.vmem [shape: f32[1,24], index: 4, kind: input, shape index: {}]
  %s5 = inlined_call_operand.vmem [shape: bf16[24,4], index: 5, kind: input, shape index: {}]
  %s6 = inlined_call_operand.vmem [shape: f32[1,4], index: 6, kind: input, shape index: {}]
  %s7 = inlined_call_operand.vmem [shape: f32[2,16,16,4], index: 7, kind: output, shape index: {}]
  %s8 = sld [smem:[#allocation0]]
  $region69: #{invert_residual_forward.1} parent=0
    _
  %s10 = ssub.s32 1, %s8
  %s11 = scalar_select 0, %s10, %s8
  loop: start=0, step=1, limit=6
  $region2: #{invert_residual_forward.1} parent=0 // loop_pre_header
    _
  $region3: #{invert_residual_forward.1} parent=0 // loop_header
    %s13 = sphi 0, %s17
    %p14 = scmp.ge.s32.totalorder %s13, 6
    %s20 = sphi 0, %s32
    %s21 = sphi 0, %s28
    %s22 = sphi 0, %s20
    %s23 = sphi 0, %s21
    %s24 = sphi 0, %s22
    %s25 = sphi 0, %s23
    %s35 = sphi 0, %s37
    %s38 = sphi 0, %s35
    %s39 = sphi 0, %s38
    %s55 = sphi 0, %s39
    %s59 = sphi 0, %s59
    %s61 = sphi 0, %s59
    %s62 = sphi 0, %s61
    %s76 = sphi 0, %s62
    %s80 = sphi 0, %s80
    %s82 = sphi 0, %s80
    %s83 = sphi 0, %s82
    %s97 = sphi 0, %s83
    %s101 = sphi 0, %s101
    %s103 = sphi 0, %s101
    %s104 = sphi 0, %s103
    %s118 = sphi 0, %s104
    %s122 = sphi 0, %s122
    %s124 = sphi 0, %s122
    %s125 = sphi 0, %s124
    %s139 = sphi 0, %s125
    %s143 = sphi 0, %s143
    %s145 = sphi 0, %s143
    %s146 = sphi 0, %s145
    %s160 = sphi 0, %s146
    %s164 = sphi 0, %s164
    %s166 = sphi 0, %s164
    %s167 = sphi 0, %s166
    %s181 = sphi 0, %s167
    %s189 = sphi 0, %s191
    %s192 = sphi 0, %s189
    %s193 = sphi 0, %s192
    %s209 = sphi 0, %s193
  $region4: #{invert_residual_forward.1} parent=0 // loop_header_branch
    %16 = sbr.rel (%p14) target = $region8
  $region5: #{invert_residual_forward.1} parent=0 // loop_body
    %s18 = ssub.s32 %s13, 1
    %s19 = ssub.s32 %s13, 2
    %s26 = sadd.s32 1, %s21
    %p27 = scmp.ge.s32.totalorder %s26, 2
    %s28 = scalar_select %p27, 0, %s26
    %s29 = sadd.s32 1, %s20
    %s30 = scalar_select %p27, %s29, %s20
    %p31 = scmp.ge.s32.totalorder %s30, 2
    %s32 = scalar_select %p31, 0, %s30
    %s33 = ssub.s32 %s20, %s32
    %p34 = scmp.eq.s32.totalorder %s33, 0
    %s36 = sadd.s32 %s35, 1
    %s37 = scalar_select %p34, %s35, %s36
    %p40 = pneg %p34
    %p41 = scmp.eq.s32.totalorder %s13, 3
    %p42 = por %p40, %p41
    %p43 = scmp.ne.s32.totalorder %s35, %s38
    %p44 = scmp.eq.s32.totalorder %s13, 0
    %p45 = por %p43, %p44
    %p46 = scmp.ne.s32.totalorder %s35, %s38
    %p47 = scmp.eq.s32.totalorder %s18, 3
    %p48 = por %p46, %p47
    %p49 = scmp.ne.s32.totalorder %s38, %s39
    %p50 = scmp.eq.s32.totalorder %s18, 0
    %p51 = por %p49, %p50
    %p52 = scmp.ne.s32.totalorder %s38, %s39
    %p53 = scmp.eq.s32.totalorder %s19, 3
    %p54 = por %p52, %p53
    %p56 = scmp.ne.s32.totalorder %s39, %s55
    %p57 = scmp.eq.s32.totalorder %s19, 0
    %p58 = por %p56, %p57
    %s60 = sadd.s32 %s59, 1
    %p63 = scmp.eq.s32.totalorder %s13, 3
    %p64 = scmp.ne.s32.totalorder %s59, %s61
    %p65 = scmp.eq.s32.totalorder %s13, 0
    %p66 = por %p64, %p65
    %p67 = scmp.ne.s32.totalorder %s59, %s61
    %p68 = scmp.eq.s32.totalorder %s18, 3
    %p69 = por %p67, %p68
    %p70 = scmp.ne.s32.totalorder %s61, %s62
    %p71 = scmp.eq.s32.totalorder %s18, 0
    %p72 = por %p70, %p71
    %p73 = scmp.ne.s32.totalorder %s61, %s62
    %p74 = scmp.eq.s32.totalorder %s19, 3
    %p75 = por %p73, %p74
    %p77 = scmp.ne.s32.totalorder %s62, %s76
    %p78 = scmp.eq.s32.totalorder %s19, 0
    %p79 = por %p77, %p78
    %s81 = sadd.s32 %s80, 1
    %p84 = scmp.eq.s32.totalorder %s13, 3
    %p85 = scmp.ne.s32.totalorder %s80, %s82
    %p86 = scmp.eq.s32.totalorder %s13, 0
    %p87 = por %p85, %p86
    %p88 = scmp.ne.s32.totalorder %s80, %s82
    %p89 = scmp.eq.s32.totalorder %s18, 3
    %p90 = por %p88, %p89
    %p91 = scmp.ne.s32.totalorder %s82, %s83
    %p92 = scmp.eq.s32.totalorder %s18, 0
    %p93 = por %p91, %p92
    %p94 = scmp.ne.s32.totalorder %s82, %s83
    %p95 = scmp.eq.s32.totalorder %s19, 3
    %p96 = por %p94, %p95
    %p98 = scmp.ne.s32.totalorder %s83, %s97
    %p99 = scmp.eq.s32.totalorder %s19, 0
    %p100 = por %p98, %p99
    %s102 = sadd.s32 %s101, 1
    %p105 = scmp.eq.s32.totalorder %s13, 3
    %p106 = scmp.ne.s32.totalorder %s101, %s103
    %p107 = scmp.eq.s32.totalorder %s13, 0
    %p108 = por %p106, %p107
    %p109 = scmp.ne.s32.totalorder %s101, %s103
    %p110 = scmp.eq.s32.totalorder %s18, 3
    %p111 = por %p109, %p110
    %p112 = scmp.ne.s32.totalorder %s103, %s104
    %p113 = scmp.eq.s32.totalorder %s18, 0
    %p114 = por %p112, %p113
    %p115 = scmp.ne.s32.totalorder %s103, %s104
    %p116 = scmp.eq.s32.totalorder %s19, 3
    %p117 = por %p115, %p116
    %p119 = scmp.ne.s32.totalorder %s104, %s118
    %p120 = scmp.eq.s32.totalorder %s19, 0
    %p121 = por %p119, %p120
    %s123 = sadd.s32 %s122, 1
    %p126 = scmp.eq.s32.totalorder %s13, 3
    %p127 = scmp.ne.s32.totalorder %s122, %s124
    %p128 = scmp.eq.s32.totalorder %s13, 0
    %p129 = por %p127, %p128
    %p130 = scmp.ne.s32.totalorder %s122, %s124
    %p131 = scmp.eq.s32.totalorder %s18, 3
    %p132 = por %p130, %p131
    %p133 = scmp.ne.s32.totalorder %s124, %s125
    %p134 = scmp.eq.s32.totalorder %s18, 0
    %p135 = por %p133, %p134
    %p136 = scmp.ne.s32.totalorder %s124, %s125
    %p137 = scmp.eq.s32.totalorder %s19, 3
    %p138 = por %p136, %p137
    %p140 = scmp.ne.s32.totalorder %s125, %s139
    %p141 = scmp.eq.s32.totalorder %s19, 0
    %p142 = por %p140, %p141
    %s144 = sadd.s32 %s143, 1
    %p147 = scmp.eq.s32.totalorder %s13, 3
    %p148 = scmp.ne.s32.totalorder %s143, %s145
    %p149 = scmp.eq.s32.totalorder %s13, 0
    %p150 = por %p148, %p149
    %p151 = scmp.ne.s32.totalorder %s143, %s145
    %p152 = scmp.eq.s32.totalorder %s18, 3
    %p153 = por %p151, %p152
    %p154 = scmp.ne.s32.totalorder %s145, %s146
    %p155 = scmp.eq.s32.totalorder %s18, 0
    %p156 = por %p154, %p155
    %p157 = scmp.ne.s32.totalorder %s145, %s146
    %p158 = scmp.eq.s32.totalorder %s19, 3
    %p159 = por %p157, %p158
    %p161 = scmp.ne.s32.totalorder %s146, %s160
    %p162 = scmp.eq.s32.totalorder %s19, 0
    %p163 = por %p161, %p162
    %s165 = sadd.s32 %s164, 1
    %p168 = scmp.eq.s32.totalorder %s13, 3
    %p169 = scmp.ne.s32.totalorder %s164, %s166
    %p170 = scmp.eq.s32.totalorder %s13, 0
    %p171 = por %p169, %p170
    %p172 = scmp.ne.s32.totalorder %s164, %s166
    %p173 = scmp.eq.s32.totalorder %s18, 3
    %p174 = por %p172, %p173
    %p175 = scmp.ne.s32.totalorder %s166, %s167
    %p176 = scmp.eq.s32.totalorder %s18, 0
    %p177 = por %p175, %p176
    %p178 = scmp.ne.s32.totalorder %s166, %s167
    %p179 = scmp.eq.s32.totalorder %s19, 3
    %p180 = por %p178, %p179
    %p182 = scmp.ne.s32.totalorder %s167, %s181
    %p183 = scmp.eq.s32.totalorder %s19, 0
    %p184 = por %p182, %p183
    %s185 = ssub.s32 %s20, %s32
    %s186 = ssub.s32 %s21, %s28
    %s187 = sor.u32 %s185, %s186
    %p188 = scmp.eq.s32.totalorder %s187, 0
    %s190 = sadd.s32 %s189, 1
    %s191 = scalar_select %p188, %s189, %s190
    %p194 = pneg %p188
    %p195 = scmp.eq.s32.totalorder %s13, 3
    %p196 = por %p194, %p195
    %p197 = scmp.ne.s32.totalorder %s189, %s192
    %p198 = scmp.eq.s32.totalorder %s13, 0
    %p199 = por %p197, %p198
    %p200 = scmp.ne.s32.totalorder %s189, %s192
    %p201 = scmp.eq.s32.totalorder %s18, 3
    %p202 = por %p200, %p201
    %p203 = scmp.ne.s32.totalorder %s192, %s193
    %p204 = scmp.eq.s32.totalorder %s18, 0
    %p205 = por %p203, %p204
    %p206 = scmp.ne.s32.totalorder %s192, %s193
    %p207 = scmp.eq.s32.totalorder %s19, 3
    %p208 = por %p206, %p207
    %p210 = scmp.ne.s32.totalorder %s193, %s209
    %p211 = scmp.eq.s32.totalorder %s19, 0
    %p212 = por %p210, %p211
    %p213 = scmp.le.s32.totalorder 1, %s13
    %p214 = scmp.lt.s32.totalorder %s13, 5
    %p215 = pnand %p213, %p214
    %p216 = pneg %p215
    // Predicated region
    $region9: #{invert_residual_forward.1} parent=5 // pred_check
      _
    $region10: #{invert_residual_forward.1} parent=5 // pred_check_branch
      %218 = sbr.rel (%p215) target = $region12
    $region11: #{invert_residual_forward.1} parent=5 // pred_region
      %s219 = ssub.s32 %s13, 1
      // Predicated region
      $region13: #{invert_residual_forward.1} parent=11 // pred_check
        %p220 = pneg %p72
      $region14: #{invert_residual_forward.1} parent=11 // pred_check_branch
        %222 = sbr.rel (%p220) target = $region16
      $region15: #{invert_residual_forward.1} parent=11 // pred_region
        _
      $region16: #{invert_residual_forward.1} parent=11 // pred_fallthru
        _
      // Predicated region
      $region17: #{invert_residual_forward.1} parent=11 // pred_check
        %p223 = pneg %p93
      $region18: #{invert_residual_forward.1} parent=11 // pred_check_branch
        %225 = sbr.rel (%p223) target = $region20
      $region19: #{invert_residual_forward.1} parent=11 // pred_region
        _
      $region20: #{invert_residual_forward.1} parent=11 // pred_fallthru
        _
      // Predicated region
      $region21: #{invert_residual_forward.1} parent=11 // pred_check
        %p226 = pneg %p114
      $region22: #{invert_residual_forward.1} parent=11 // pred_check_branch
        %228 = sbr.rel (%p226) target = $region24
      $region23: #{invert_residual_forward.1} parent=11 // pred_region
        _
      $region24: #{invert_residual_forward.1} parent=11 // pred_fallthru
        _
      // Predicated region
      $region25: #{invert_residual_forward.1} parent=11 // pred_check
        %p229 = pneg %p135
      $region26: #{invert_residual_forward.1} parent=11 // pred_check_branch
        %231 = sbr.rel (%p229) target = $region28
      $region27: #{invert_residual_forward.1} parent=11 // pred_region
        _
      $region28: #{invert_residual_forward.1} parent=11 // pred_fallthru
        _
      // Predicated region
      $region29: #{invert_residual_forward.1} parent=11 // pred_check
        %p232 = pneg %p156
      $region30: #{invert_residual_forward.1} parent=11 // pred_check_branch
        %234 = sbr.rel (%p232) target = $region32
      $region31: #{invert_residual_forward.1} parent=11 // pred_region
        _
      $region32: #{invert_residual_forward.1} parent=11 // pred_fallthru
        _
      // Predicated region
      $region33: #{invert_residual_forward.1} parent=11 // pred_check
        %p235 = pneg %p177
      $region34: #{invert_residual_forward.1} parent=11 // pred_check_branch
        %237 = sbr.rel (%p235) target = $region36
      $region35: #{invert_residual_forward.1} parent=11 // pred_region
        _
      $region36: #{invert_residual_forward.1} parent=11 // pred_fallthru
        _
    $region12: #{invert_residual_forward.1} parent=5 // pred_fallthru
      _
    %p238 = scmp.lt.s32.totalorder %s13, 4
    // Predicated region
    $region37: #{invert_residual_forward.1} parent=5 // pred_check
      %p239 = pneg %p238
    $region38: #{invert_residual_forward.1} parent=5 // pred_check_branch
      %241 = sbr.rel (%p239) target = $region40
    $region39: #{invert_residual_forward.1} parent=5 // pred_region
      // Predicated region
      $region41: #{invert_residual_forward.1} parent=39 // pred_check
        %p242 = pneg %p45
      $region42: #{invert_residual_forward.1} parent=39 // pred_check_branch
        %244 = sbr.rel (%p242) target = $region44
      $region43: #{invert_residual_forward.1} parent=39 // pred_region
        %p245 = scmp.lt.s32.totalorder %s20, 1
        %s246 = scalar_select %p245, %s20, 1
        %s247 = smul.addr %s246, 54
        %s248 = smul.addr %s247, 8
        %s249 = scalar_lea.vmem %s0, %s248
      $region44: #{invert_residual_forward.1} parent=39 // pred_fallthru
        _
    $region40: #{invert_residual_forward.1} parent=5 // pred_fallthru
      _
    %p250 = scmp.le.s32.totalorder 1, %s13
    %p251 = scmp.lt.s32.totalorder %s13, 5
    %p252 = pnand %p250, %p251
    %p253 = pneg %p252
    // Predicated region
    $region45: #{invert_residual_forward.1} parent=5 // pred_check
      _
    $region46: #{invert_residual_forward.1} parent=5 // pred_check_branch
      %255 = sbr.rel (%p252) target = $region48
    $region47: #{invert_residual_forward.1} parent=5 // pred_region
      %s256 = ssub.s32 %s13, 1
      %p257 = scmp.lt.s32.totalorder %s22, 1
      %s258 = scalar_select %p257, %s22, 1
      %s259 = smul.addr %s258, 54
      %s260 = smul.addr %s259, 8
      %s261 = scalar_lea.vmem %s0, %s260
      %p262 = pneg %p51
      %p263 = pneg %p48
      %p264 = pneg %p72
      %p265 = pneg %p69
      %p266 = pneg %p93
      %p267 = pneg %p90
      %p268 = pneg %p114
      %p269 = pneg %p111
      %p270 = pneg %p135
      %p271 = pneg %p132
      %p272 = pneg %p156
      %p273 = pneg %p153
      %p274 = pneg %p177
      %p275 = pneg %p174
      %p276 = pneg %p205
      %p277 = pneg %p202
      %s278 = smul.u32 8, %s23
      %p279 = scmp.lt.s32.totalorder %s22, 1
      %s280 = scalar_select %p279, %s22, 1
      %p281 = scmp.lt.s32.totalorder %s278, 15
      %s282 = scalar_select %p281, %s278, 15
      %s283 = smul.addr %s282, 2
      %s284 = smul.addr %s280, 32
      %s285 = sadd.s32 %s283, %s284
      %s286 = smul.addr %s285, 8
      %s287 = scalar_lea.vmem %s7, %s286
      %p288 = scmp.lt.s32.totalorder %s22, 1
      %s289 = scalar_select %p288, %s22, 1
      %s290 = smul.addr %s289, 54
      %s291 = smul.addr %s290, 8
      %s292 = scalar_lea.vmem %s0, %s291
      %s293 = smul.u32 8, %s23
      %p294 = scmp.lt.s32.totalorder %s22, 1
      %s295 = scalar_select %p294, %s22, 1
      %p296 = scmp.lt.s32.totalorder %s293, 15
      %s297 = scalar_select %p296, %s293, 15
      %s298 = smul.addr %s297, 2
      %s299 = smul.addr %s295, 32
      %s300 = sadd.s32 %s298, %s299
      %s301 = smul.addr %s300, 8
      %s302 = scalar_lea.vmem %s7, %s301
      %s303 = smul.u32 8, %s23
      %s305 = smul.u32 %s23, 8
      %s306 = smul.u32 %s305, 24
      %s307 = scalar_lea.vmem %s292, %s306
      %v308 = vld [vmem:[%s307] sm:$0xff]
      %v309 = vld [vmem:[%s307 + $0x8] sm:$0xff]
      %v310 = vld [vmem:[%s307 + $0x10] sm:$0xff]
      %v311 = vld [vmem:[%s307 + $0x18] sm:$0xff]
      %v312 = vld [vmem:[%s307 + $0x20] sm:$0xff]
      %v313 = vld [vmem:[%s307 + $0x28] sm:$0xff]
      %v314 = vld [vmem:[%s307 + $0x30] sm:$0xff]
      %v315 = vld [vmem:[%s307 + $0x38] sm:$0xff]
      %v316 = vld [vmem:[%s307 + $0x40] sm:$0xff]
      %v317 = vld [vmem:[%s307 + $0x48] sm:$0xff]
      %v318 = vld [vmem:[%s307 + $0x50] sm:$0xff]
      %v319 = vld [vmem:[%s307 + $0x58] sm:$0xff]
      %v320 = vld [vmem:[%s307 + $0x60] sm:$0xff]
      %v321 = vld [vmem:[%s307 + $0x68] sm:$0xff]
      %v322 = vld [vmem:[%s307 + $0x70] sm:$0xff]
      %v323 = vld [vmem:[%s307 + $0x78] sm:$0xff]
      %v324 = vld [vmem:[%s307 + $0x80] sm:$0xff]
      %v325 = vld [vmem:[%s307 + $0x88] sm:$0xff]
      %v326 = vld [vmem:[%s307 + $0x90] sm:$0xff]
      %v327 = vld [vmem:[%s307 + $0x98] sm:$0xff]
      %v328 = vld [vmem:[%s307 + $0xa0] sm:$0xff]
      %v329 = vld [vmem:[%s307 + $0xa8] sm:$0xff]
      %v330 = vld [vmem:[%s307 + $0xb0] sm:$0xff]
      %v331 = vld [vmem:[%s307 + $0xb8] sm:$0xff]
      %v332 = vld [vmem:[%s307 + $0xc0] sm:$0xff]
      %v333 = vld [vmem:[%s307 + $0xc8] sm:$0xff]
      %v334 = vld [vmem:[%s307 + $0xd0] sm:$0xff]
      %v335 = vld [vmem:[%s307 + $0xd8] sm:$0xff]
      %v336 = vld [vmem:[%s307 + $0xe0] sm:$0xff]
      %v337 = vld [vmem:[%s307 + $0xe8] sm:$0xff]
      %v338 = vpack.c.bf16 %v309, %v308
      %v339 = vpack.c.bf16 %v311, %v310
      %v340 = vpack.c.bf16 %v313, %v312
      %v341 = vpack.c.bf16 %v315, %v314
      %v342 = vpack.c.bf16 %v317, %v316
      %v343 = vpack.c.bf16 %v319, %v318
      %v344 = vpack.c.bf16 %v321, %v320
      %v345 = vpack.c.bf16 %v323, %v322
      %v346 = vpack.c.bf16 %v325, %v324
      %v347 = vpack.c.bf16 %v327, %v326
      %v348 = vpack.c.bf16 %v329, %v328
      %v349 = vpack.c.bf16 %v331, %v330
      %v350 = vpack.c.bf16 %v333, %v332
      %v351 = vpack.c.bf16 %v335, %v334
      %v352 = vpack.c.bf16 %v337, %v336
      %v353 = vld [vmem:[%s1] sm:$0x3]
      %v354 = vld [vmem:[%s2] sm:$0x1]
      %v356 = vperm.slane %v354, 0
      %vm358 = vcmask 31744
      %v360 = vsel %vm358, %v338, 0
      %v363 = vsel %vm358, %v339, 0
      %v366 = vsel %vm358, %v340, 0
      %v369 = vsel %vm358, %v341, 0
      %v372 = vsel %vm358, %v342, 0
      %v375 = vsel %vm358, %v343, 0
      %v378 = vsel %vm358, %v344, 0
      %v381 = vsel %vm358, %v345, 0
      %v384 = vsel %vm358, %v346, 0
      %v387 = vsel %vm358, %v347, 0
      %v390 = vsel %vm358, %v348, 0
      %v393 = vsel %vm358, %v349, 0
      %v396 = vsel %vm358, %v350, 0
      %v399 = vsel %vm358, %v351, 0
      %v402 = vsel %vm358, %v352, 0
      %vm404 = vcmask 1041408
      %v406 = vsel %vm404, %v353, 0
      %408 = vmatpush.bf16.msra.mxu0 0
      %409 = vmatpush.bf16.msra.mxu0 0
      %410 = vmatpush.bf16.msra.mxu0 0
      %411 = vmatpush.bf16.msra.mxu0 0
      %412 = vmatpush.bf16.msra.mxu0 0
      %413 = vmatpush.bf16.msra.mxu0 0
      %414 = vmatpush.bf16.msra.mxu0 0
      %415 = vmatpush.bf16.msra.mxu0 %v406
      %416 = vmatmul.bf16.gmra.mxu0 %v360
      %v417 = vpop.f32.mrf.mxu0
      %v418 = vadd.f32 %v356, %v417
      %v419 = vpop.f32.mrf.mxu0
      %v420 = vadd.f32 %v356, %v419
      %421 = vmatmul.bf16.gmra.mxu0 %v363
      %v422 = vpop.f32.mrf.mxu0
      %v423 = vadd.f32 %v356, %v422
      %v424 = vpop.f32.mrf.mxu0
      %v425 = vadd.f32 %v356, %v424
      %426 = vmatmul.bf16.gmra.mxu0 %v366
      %v427 = vpop.f32.mrf.mxu0
      %v428 = vadd.f32 %v356, %v427
      %v429 = vpop.f32.mrf.mxu0
      %v430 = vadd.f32 %v356, %v429
      %431 = vmatmul.bf16.gmra.mxu0 %v369
      %v432 = vpop.f32.mrf.mxu0
      %v433 = vadd.f32 %v356, %v432
      %v434 = vpop.f32.mrf.mxu0
      %v435 = vadd.f32 %v356, %v434
      %436 = vmatmul.bf16.gmra.mxu0 %v372
      %v437 = vpop.f32.mrf.mxu0
      %v438 = vadd.f32 %v356, %v437
      %v439 = vpop.f32.mrf.mxu0
      %v440 = vadd.f32 %v356, %v439
      %441 = vmatmul.bf16.gmra.mxu0 %v375
      %v442 = vpop.f32.mrf.mxu0
      %v443 = vadd.f32 %v356, %v442
      %v444 = vpop.f32.mrf.mxu0
      %v445 = vadd.f32 %v356, %v444
      %446 = vmatmul.bf16.gmra.mxu0 %v378
      %v447 = vpop.f32.mrf.mxu0
      %v448 = vadd.f32 %v356, %v447
      %v449 = vpop.f32.mrf.mxu0
      %v450 = vadd.f32 %v356, %v449
      %451 = vmatmul.bf16.gmra.mxu0 %v381
      %v452 = vpop.f32.mrf.mxu0
      %v453 = vadd.f32 %v356, %v452
      %v454 = vpop.f32.mrf.mxu0
      %v455 = vadd.f32 %v356, %v454
      %456 = vmatmul.bf16.gmra.mxu0 %v384
      %v457 = vpop.f32.mrf.mxu0
      %v458 = vadd.f32 %v356, %v457
      %v459 = vpop.f32.mrf.mxu0
      %v460 = vadd.f32 %v356, %v459
      %461 = vmatmul.bf16.gmra.mxu0 %v387
      %v462 = vpop.f32.mrf.mxu0
      %v463 = vadd.f32 %v356, %v462
      %v464 = vpop.f32.mrf.mxu0
      %v465 = vadd.f32 %v356, %v464
      %466 = vmatmul.bf16.gmra.mxu0 %v390
      %v467 = vpop.f32.mrf.mxu0
      %v468 = vadd.f32 %v356, %v467
      %v469 = vpop.f32.mrf.mxu0
      %v470 = vadd.f32 %v356, %v469
      %471 = vmatmul.bf16.gmra.mxu0 %v393
      %v472 = vpop.f32.mrf.mxu0
      %v473 = vadd.f32 %v356, %v472
      %v474 = vpop.f32.mrf.mxu0
      %v475 = vadd.f32 %v356, %v474
      %476 = vmatmul.bf16.gmra.mxu0 %v396
      %v477 = vpop.f32.mrf.mxu0
      %v478 = vadd.f32 %v356, %v477
      %v479 = vpop.f32.mrf.mxu0
      %v480 = vadd.f32 %v356, %v479
      %481 = vmatmul.bf16.gmra.mxu0 %v399
      %v482 = vpop.f32.mrf.mxu0
      %v483 = vadd.f32 %v356, %v482
      %v484 = vpop.f32.mrf.mxu0
      %v485 = vadd.f32 %v356, %v484
      %486 = vmatmul.bf16.gmra.mxu0 %v402
      %v487 = vpop.f32.mrf.mxu0
      %v488 = vadd.f32 %v356, %v487
      %v489 = vpop.f32.mrf.mxu0
      %v490 = vadd.f32 %v356, %v489
      %491 = vdwg.mxu0
      %v492 = vmax.f32 %v418, 0.0
      %v493 = vmax.f32 %v420, 0.0
      %v494 = vmax.f32 %v423, 0.0
      %v495 = vmax.f32 %v425, 0.0
      %v496 = vmax.f32 %v428, 0.0
      %v497 = vmax.f32 %v430, 0.0
      %v498 = vmax.f32 %v433, 0.0
      %v499 = vmax.f32 %v435, 0.0
      %v500 = vmax.f32 %v438, 0.0
      %v501 = vmax.f32 %v440, 0.0
      %v502 = vmax.f32 %v443, 0.0
      %v503 = vmax.f32 %v445, 0.0
      %v504 = vmax.f32 %v448, 0.0
      %v505 = vmax.f32 %v450, 0.0
      %v506 = vmax.f32 %v453, 0.0
      %v507 = vmax.f32 %v455, 0.0
      %v508 = vmax.f32 %v458, 0.0
      %v509 = vmax.f32 %v460, 0.0
      %v510 = vmax.f32 %v463, 0.0
      %v511 = vmax.f32 %v465, 0.0
      %v512 = vmax.f32 %v468, 0.0
      %v513 = vmax.f32 %v470, 0.0
      %v514 = vmax.f32 %v473, 0.0
      %v515 = vmax.f32 %v475, 0.0
      %v516 = vmax.f32 %v478, 0.0
      %v517 = vmax.f32 %v480, 0.0
      %v518 = vmax.f32 %v483, 0.0
      %v519 = vmax.f32 %v485, 0.0
      %v520 = vmax.f32 %v488, 0.0
      %v521 = vmax.f32 %v490, 0.0
      %v522 = vmin.f32 %v492, 6.0
      %v523 = vmin.f32 %v493, 6.0
      %v524 = vmin.f32 %v494, 6.0
      %v525 = vmin.f32 %v495, 6.0
      %v526 = vmin.f32 %v496, 6.0
      %v527 = vmin.f32 %v497, 6.0
      %v528 = vmin.f32 %v498, 6.0
      %v529 = vmin.f32 %v499, 6.0
      %v530 = vmin.f32 %v500, 6.0
      %v531 = vmin.f32 %v501, 6.0
      %v532 = vmin.f32 %v502, 6.0
      %v533 = vmin.f32 %v503, 6.0
      %v534 = vmin.f32 %v504, 6.0
      %v535 = vmin.f32 %v505, 6.0
      %v536 = vmin.f32 %v506, 6.0
      %v537 = vmin.f32 %v507, 6.0
      %v538 = vmin.f32 %v508, 6.0
      %v539 = vmin.f32 %v509, 6.0
      %v540 = vmin.f32 %v510, 6.0
      %v541 = vmin.f32 %v511, 6.0
      %v542 = vmin.f32 %v512, 6.0
      %v543 = vmin.f32 %v513, 6.0
      %v544 = vmin.f32 %v514, 6.0
      %v545 = vmin.f32 %v515, 6.0
      %v546 = vmin.f32 %v516, 6.0
      %v547 = vmin.f32 %v517, 6.0
      %v548 = vmin.f32 %v518, 6.0
      %v549 = vmin.f32 %v519, 6.0
      %v550 = vmin.f32 %v520, 6.0
      %v551 = vmin.f32 %v521, 6.0
      %vm552 = vcmask 195584
      %553 = vst.msk [vmem:[#allocation2] sm:$0xff] %vm552, %v522
      %554 = vst.msk [vmem:[#allocation2 + $0x8] sm:$0xff] %vm552, %v523
      %555 = vst.msk [vmem:[#allocation2 + $0x10] sm:$0xff] %vm552, %v524
      %556 = vst.msk [vmem:[#allocation2 + $0x18] sm:$0xff] %vm552, %v525
      %557 = vst.msk [vmem:[#allocation2 + $0x20] sm:$0xff] %vm552, %v526
      %558 = vst.msk [vmem:[#allocation2 + $0x28] sm:$0xff] %vm552, %v527
      %559 = vst.msk [vmem:[#allocation2 + $0x30] sm:$0xff] %vm552, %v528
      %560 = vst.msk [vmem:[#allocation2 + $0x38] sm:$0xff] %vm552, %v529
      %561 = vst.msk [vmem:[#allocation2 + $0x40] sm:$0xff] %vm552, %v530
      %562 = vst.msk [vmem:[#allocation2 + $0x48] sm:$0xff] %vm552, %v531
      %563 = vst.msk [vmem:[#allocation2 + $0x50] sm:$0xff] %vm552, %v532
      %564 = vst.msk [vmem:[#allocation2 + $0x58] sm:$0xff] %vm552, %v533
      %565 = vst.msk [vmem:[#allocation2 + $0x60] sm:$0xff] %vm552, %v534
      %566 = vst.msk [vmem:[#allocation2 + $0x68] sm:$0xff] %vm552, %v535
      %567 = vst.msk [vmem:[#allocation2 + $0x70] sm:$0xff] %vm552, %v536
      %568 = vst.msk [vmem:[#allocation2 + $0x78] sm:$0xff] %vm552, %v537
      %569 = vst.msk [vmem:[#allocation2 + $0x80] sm:$0xff] %vm552, %v538
      %570 = vst.msk [vmem:[#allocation2 + $0x88] sm:$0xff] %vm552, %v539
      %571 = vst.msk [vmem:[#allocation2 + $0x90] sm:$0xff] %vm552, %v540
      %572 = vst.msk [vmem:[#allocation2 + $0x98] sm:$0xff] %vm552, %v541
      %573 = vst.msk [vmem:[#allocation2 + $0xa0] sm:$0xff] %vm552, %v542
      %574 = vst.msk [vmem:[#allocation2 + $0xa8] sm:$0xff] %vm552, %v543
      %575 = vst.msk [vmem:[#allocation2 + $0xb0] sm:$0xff] %vm552, %v544
      %576 = vst.msk [vmem:[#allocation2 + $0xb8] sm:$0xff] %vm552, %v545
      %577 = vst.msk [vmem:[#allocation2 + $0xc0] sm:$0xff] %vm552, %v546
      %578 = vst.msk [vmem:[#allocation2 + $0xc8] sm:$0xff] %vm552, %v547
      %579 = vst.msk [vmem:[#allocation2 + $0xd0] sm:$0xff] %vm552, %v548
      %580 = vst.msk [vmem:[#allocation2 + $0xd8] sm:$0xff] %vm552, %v549
      %581 = vst.msk [vmem:[#allocation2 + $0xe0] sm:$0xff] %vm552, %v550
      %582 = vst.msk [vmem:[#allocation2 + $0xe8] sm:$0xff] %vm552, %v551
      %vm583 = vcmask 188416
      %584 = vst.msk [vmem:[#allocation2] sm:$0x1] %vm583, 0.0
      %585 = vst.msk [vmem:[#allocation2 + $0x18] sm:$0x1] %vm583, 0.0
      %586 = vst.msk [vmem:[#allocation2 + $0x30] sm:$0x1] %vm583, 0.0
      %587 = vst.msk [vmem:[#allocation2 + $0x48] sm:$0x1] %vm583, 0.0
      %588 = vst.msk [vmem:[#allocation2 + $0x60] sm:$0x1] %vm583, 0.0
      %589 = vst.msk [vmem:[#allocation2 + $0x78] sm:$0x1] %vm583, 0.0
      %590 = vst.msk [vmem:[#allocation2 + $0x90] sm:$0x1] %vm583, 0.0
      %591 = vst.msk [vmem:[#allocation2 + $0xa8] sm:$0x1] %vm583, 0.0
      %592 = vst.msk [vmem:[#allocation2 + $0xc0] sm:$0x1] %vm583, 0.0
      %593 = vst.msk [vmem:[#allocation2 + $0xd8] sm:$0x1] %vm583, 0.0
      %594 = vst.msk [vmem:[#allocation2 + $0x11] sm:$0x1] %vm583, 0.0
      %595 = vst.msk [vmem:[#allocation2 + $0x29] sm:$0x1] %vm583, 0.0
      %596 = vst.msk [vmem:[#allocation2 + $0x41] sm:$0x1] %vm583, 0.0
      %597 = vst.msk [vmem:[#allocation2 + $0x59] sm:$0x1] %vm583, 0.0
      %598 = vst.msk [vmem:[#allocation2 + $0x71] sm:$0x1] %vm583, 0.0
      %599 = vst.msk [vmem:[#allocation2 + $0x89] sm:$0x1] %vm583, 0.0
      %600 = vst.msk [vmem:[#allocation2 + $0xa1] sm:$0x1] %vm583, 0.0
      %601 = vst.msk [vmem:[#allocation2 + $0xb9] sm:$0x1] %vm583, 0.0
      %602 = vst.msk [vmem:[#allocation2 + $0xd1] sm:$0x1] %vm583, 0.0
      %603 = vst.msk [vmem:[#allocation2 + $0xe9] sm:$0x1] %vm583, 0.0
      %p604 = scmp.eq.s32.totalorder %s305, 0
      // Predicated region
      $region49: #{invert_residual_forward.1} parent=47 // pred_check
        %p605 = pneg %p604
      $region50: #{invert_residual_forward.1} parent=47 // pred_check_branch
        %607 = sbr.rel (%p605) target = $region52
      $region51: #{invert_residual_forward.1} parent=47 // pred_region
        %608 = vst.msk [vmem:[#allocation2] sm:$0xff] %vm552, 0.0
        %609 = vst.msk [vmem:[#allocation2 + $0x8] sm:$0xff] %vm552, 0.0
        %610 = vst.msk [vmem:[#allocation2 + $0x10] sm:$0xff] %vm552, 0.0
      $region52: #{invert_residual_forward.1} parent=47 // pred_fallthru
        _
      %s611 = sadd.s32 %s305, 9
      %p612 = scmp.eq.s32.totalorder %s611, 17
      // Predicated region
      $region53: #{invert_residual_forward.1} parent=47 // pred_check
        %p613 = pneg %p612
      $region54: #{invert_residual_forward.1} parent=47 // pred_check_branch
        %615 = sbr.rel (%p613) target = $region56
      $region55: #{invert_residual_forward.1} parent=47 // pred_region
        %s616 = scalar_lea.vmem [#allocation2], 216
        %617 = vst.msk [vmem:[%s616] sm:$0xff] %vm552, 0.0
        %618 = vst.msk [vmem:[%s616 + $0x8] sm:$0xff] %vm552, 0.0
        %619 = vst.msk [vmem:[%s616 + $0x10] sm:$0xff] %vm552, 0.0
      $region56: #{invert_residual_forward.1} parent=47 // pred_fallthru
        _
      %v620 = vld [vmem:[%s3] sm:$0xff]
      %v621 = vld [vmem:[%s3 + $0x8] sm:$0x1]
      %v622 = vld [vmem:[#allocation2] sm:$0xff]
      %v623 = vld [vmem:[#allocation2 + $0x8] sm:$0xff]
      %v624 = vld [vmem:[#allocation2 + $0x18] sm:$0xff]
      %v625 = vld [vmem:[#allocation2 + $0x20] sm:$0xff]
      %v626 = vld [vmem:[#allocation2 + $0x30] sm:$0xff]
      %v627 = vld [vmem:[#allocation2 + $0x38] sm:$0xff]
      %v628 = vld [vmem:[#allocation2 + $0x48] sm:$0xff]
      %v629 = vld [vmem:[#allocation2 + $0x50] sm:$0xff]
      %v630 = vld [vmem:[#allocation2 + $0x60] sm:$0xff]
      %v631 = vld [vmem:[#allocation2 + $0x68] sm:$0xff]
      %v632 = vld [vmem:[#allocation2 + $0x78] sm:$0xff]
      %v633 = vld [vmem:[#allocation2 + $0x80] sm:$0xff]
      %v634 = vld [vmem:[#allocation2 + $0x90] sm:$0xff]
      %v635 = vld [vmem:[#allocation2 + $0x98] sm:$0xff]
      %v636 = vld [vmem:[#allocation2 + $0xa8] sm:$0xff]
      %v637 = vld [vmem:[#allocation2 + $0xb0] sm:$0xff]
      %v638 = vperm.slane %v620, 0
      %v639 = vmul.f32 %v622, %v638
      %v640 = vmul.f32 %v623, %v638
      %v641 = vmul.f32 %v624, %v638
      %v642 = vmul.f32 %v625, %v638
      %v643 = vmul.f32 %v626, %v638
      %v644 = vmul.f32 %v627, %v638
      %v645 = vmul.f32 %v628, %v638
      %v646 = vmul.f32 %v629, %v638
      %v647 = vmul.f32 %v630, %v638
      %v648 = vmul.f32 %v631, %v638
      %v649 = vmul.f32 %v632, %v638
      %v650 = vmul.f32 %v633, %v638
      %v651 = vmul.f32 %v634, %v638
      %v652 = vmul.f32 %v635, %v638
      %v653 = vmul.f32 %v636, %v638
      %v654 = vmul.f32 %v637, %v638
      %v655 = vadd.f32 %v639, 0.0
      %v656 = vadd.f32 %v640, 0.0
      %v657 = vadd.f32 %v641, 0.0
      %v658 = vadd.f32 %v642, 0.0
      %v659 = vadd.f32 %v643, 0.0
      %v660 = vadd.f32 %v644, 0.0
      %v661 = vadd.f32 %v645, 0.0
      %v662 = vadd.f32 %v646, 0.0
      %v663 = vadd.f32 %v647, 0.0
      %v664 = vadd.f32 %v648, 0.0
      %v665 = vadd.f32 %v649, 0.0
      %v666 = vadd.f32 %v650, 0.0
      %v667 = vadd.f32 %v651, 0.0
      %v668 = vadd.f32 %v652, 0.0
      %v669 = vadd.f32 %v653, 0.0
      %v670 = vadd.f32 %v654, 0.0
      %v671 = vld [vmem:[#allocation2 + $0x1] sm:$0xff]
      %v672 = vld [vmem:[#allocation2 + $0x9] sm:$0xff]
      %v673 = vld [vmem:[#allocation2 + $0x19] sm:$0xff]
      %v674 = vld [vmem:[#allocation2 + $0x21] sm:$0xff]
      %v675 = vld [vmem:[#allocation2 + $0x31] sm:$0xff]
      %v676 = vld [vmem:[#allocation2 + $0x39] sm:$0xff]
      %v677 = vld [vmem:[#allocation2 + $0x49] sm:$0xff]
      %v678 = vld [vmem:[#allocation2 + $0x51] sm:$0xff]
      %v679 = vld [vmem:[#allocation2 + $0x61] sm:$0xff]
      %v680 = vld [vmem:[#allocation2 + $0x69] sm:$0xff]
      %v681 = vld [vmem:[#allocation2 + $0x79] sm:$0xff]
      %v682 = vld [vmem:[#allocation2 + $0x81] sm:$0xff]
      %v683 = vld [vmem:[#allocation2 + $0x91] sm:$0xff]
      %v684 = vld [vmem:[#allocation2 + $0x99] sm:$0xff]
      %v685 = vld [vmem:[#allocation2 + $0xa9] sm:$0xff]
      %v686 = vld [vmem:[#allocation2 + $0xb1] sm:$0xff]
      %v687 = vperm.slane %v620, 1
      %v688 = vmul.f32 %v671, %v687
      %v689 = vmul.f32 %v672, %v687
      %v690 = vmul.f32 %v673, %v687
      %v691 = vmul.f32 %v674, %v687
      %v692 = vmul.f32 %v675, %v687
      %v693 = vmul.f32 %v676, %v687
      %v694 = vmul.f32 %v677, %v687
      %v695 = vmul.f32 %v678, %v687
      %v696 = vmul.f32 %v679, %v687
      %v697 = vmul.f32 %v680, %v687
      %v698 = vmul.f32 %v681, %v687
      %v699 = vmul.f32 %v682, %v687
      %v700 = vmul.f32 %v683, %v687
      %v701 = vmul.f32 %v684, %v687
      %v702 = vmul.f32 %v685, %v687
      %v703 = vmul.f32 %v686, %v687
      %v704 = vadd.f32 %v655, %v688
      %v705 = vadd.f32 %v656, %v689
      %v706 = vadd.f32 %v657, %v690
      %v707 = vadd.f32 %v658, %v691
      %v708 = vadd.f32 %v659, %v692
      %v709 = vadd.f32 %v660, %v693
      %v710 = vadd.f32 %v661, %v694
      %v711 = vadd.f32 %v662, %v695
      %v712 = vadd.f32 %v663, %v696
      %v713 = vadd.f32 %v664, %v697
      %v714 = vadd.f32 %v665, %v698
      %v715 = vadd.f32 %v666, %v699
      %v716 = vadd.f32 %v667, %v700
      %v717 = vadd.f32 %v668, %v701
      %v718 = vadd.f32 %v669, %v702
      %v719 = vadd.f32 %v670, %v703
      %v720 = vld [vmem:[#allocation2 + $0x2] sm:$0xff]
      %v721 = vld [vmem:[#allocation2 + $0xa] sm:$0xff]
      %v722 = vld [vmem:[#allocation2 + $0x1a] sm:$0xff]
      %v723 = vld [vmem:[#allocation2 + $0x22] sm:$0xff]
      %v724 = vld [vmem:[#allocation2 + $0x32] sm:$0xff]
      %v725 = vld [vmem:[#allocation2 + $0x3a] sm:$0xff]
      %v726 = vld [vmem:[#allocation2 + $0x4a] sm:$0xff]
      %v727 = vld [vmem:[#allocation2 + $0x52] sm:$0xff]
      %v728 = vld [vmem:[#allocation2 + $0x62] sm:$0xff]
      %v729 = vld [vmem:[#allocation2 + $0x6a] sm:$0xff]
      %v730 = vld [vmem:[#allocation2 + $0x7a] sm:$0xff]
      %v731 = vld [vmem:[#allocation2 + $0x82] sm:$0xff]
      %v732 = vld [vmem:[#allocation2 + $0x92] sm:$0xff]
      %v733 = vld [vmem:[#allocation2 + $0x9a] sm:$0xff]
      %v734 = vld [vmem:[#allocation2 + $0xaa] sm:$0xff]
      %v735 = vld [vmem:[#allocation2 + $0xb2] sm:$0xff]
      %v736 = vperm.slane %v620, 2
      %v737 = vmul.f32 %v720, %v736
      %v738 = vmul.f32 %v721, %v736
      %v739 = vmul.f32 %v722, %v736
      %v740 = vmul.f32 %v723, %v736
      %v741 = vmul.f32 %v724, %v736
      %v742 = vmul.f32 %v725, %v736
      %v743 = vmul.f32 %v726, %v736
      %v744 = vmul.f32 %v727, %v736
      %v745 = vmul.f32 %v728, %v736
      %v746 = vmul.f32 %v729, %v736
      %v747 = vmul.f32 %v730, %v736
      %v748 = vmul.f32 %v731, %v736
      %v749 = vmul.f32 %v732, %v736
      %v750 = vmul.f32 %v733, %v736
      %v751 = vmul.f32 %v734, %v736
      %v752 = vmul.f32 %v735, %v736
      %v753 = vadd.f32 %v704, %v737
      %v754 = vadd.f32 %v705, %v738
      %v755 = vadd.f32 %v706, %v739
      %v756 = vadd.f32 %v707, %v740
      %v757 = vadd.f32 %v708, %v741
      %v758 = vadd.f32 %v709, %v742
      %v759 = vadd.f32 %v710, %v743
      %v760 = vadd.f32 %v711, %v744
      %v761 = vadd.f32 %v712, %v745
      %v762 = vadd.f32 %v713, %v746
      %v763 = vadd.f32 %v714, %v747
      %v764 = vadd.f32 %v715, %v748
      %v765 = vadd.f32 %v716, %v749
      %v766 = vadd.f32 %v717, %v750
      %v767 = vadd.f32 %v718, %v751
      %v768 = vadd.f32 %v719, %v752
      %s769 = scalar_lea.vmem [#allocation2], 24
      %v770 = vld [vmem:[%s769] sm:$0xff]
      %v771 = vld [vmem:[%s769 + $0x8] sm:$0xff]
      %v772 = vld [vmem:[%s769 + $0x18] sm:$0xff]
      %v773 = vld [vmem:[%s769 + $0x20] sm:$0xff]
      %v774 = vld [vmem:[%s769 + $0x30] sm:$0xff]
      %v775 = vld [vmem:[%s769 + $0x38] sm:$0xff]
      %v776 = vld [vmem:[%s769 + $0x48] sm:$0xff]
      %v777 = vld [vmem:[%s769 + $0x50] sm:$0xff]
      %v778 = vld [vmem:[%s769 + $0x60] sm:$0xff]
      %v779 = vld [vmem:[%s769 + $0x68] sm:$0xff]
      %v780 = vld [vmem:[%s769 + $0x78] sm:$0xff]
      %v781 = vld [vmem:[%s769 + $0x80] sm:$0xff]
      %v782 = vld [vmem:[%s769 + $0x90] sm:$0xff]
      %v783 = vld [vmem:[%s769 + $0x98] sm:$0xff]
      %v784 = vld [vmem:[%s769 + $0xa8] sm:$0xff]
      %v785 = vld [vmem:[%s769 + $0xb0] sm:$0xff]
      %v786 = vperm.slane %v620, 3
      %v787 = vmul.f32 %v770, %v786
      %v788 = vmul.f32 %v771, %v786
      %v789 = vmul.f32 %v772, %v786
      %v790 = vmul.f32 %v773, %v786
      %v791 = vmul.f32 %v774, %v786
      %v792 = vmul.f32 %v775, %v786
      %v793 = vmul.f32 %v776, %v786
      %v794 = vmul.f32 %v777, %v786
      %v795 = vmul.f32 %v778, %v786
      %v796 = vmul.f32 %v779, %v786
      %v797 = vmul.f32 %v780, %v786
      %v798 = vmul.f32 %v781, %v786
      %v799 = vmul.f32 %v782, %v786
      %v800 = vmul.f32 %v783, %v786
      %v801 = vmul.f32 %v784, %v786
      %v802 = vmul.f32 %v785, %v786
      %v803 = vadd.f32 %v753, %v787
      %v804 = vadd.f32 %v754, %v788
      %v805 = vadd.f32 %v755, %v789
      %v806 = vadd.f32 %v756, %v790
      %v807 = vadd.f32 %v757, %v791
      %v808 = vadd.f32 %v758, %v792
      %v809 = vadd.f32 %v759, %v793
      %v810 = vadd.f32 %v760, %v794
      %v811 = vadd.f32 %v761, %v795
      %v812 = vadd.f32 %v762, %v796
      %v813 = vadd.f32 %v763, %v797
      %v814 = vadd.f32 %v764, %v798
      %v815 = vadd.f32 %v765, %v799
      %v816 = vadd.f32 %v766, %v800
      %v817 = vadd.f32 %v767, %v801
      %v818 = vadd.f32 %v768, %v802
      %v819 = vld [vmem:[%s769 + $0x1] sm:$0xff]
      %v820 = vld [vmem:[%s769 + $0x9] sm:$0xff]
      %v821 = vld [vmem:[%s769 + $0x19] sm:$0xff]
      %v822 = vld [vmem:[%s769 + $0x21] sm:$0xff]
      %v823 = vld [vmem:[%s769 + $0x31] sm:$0xff]
      %v824 = vld [vmem:[%s769 + $0x39] sm:$0xff]
      %v825 = vld [vmem:[%s769 + $0x49] sm:$0xff]
      %v826 = vld [vmem:[%s769 + $0x51] sm:$0xff]
      %v827 = vld [vmem:[%s769 + $0x61] sm:$0xff]
      %v828 = vld [vmem:[%s769 + $0x69] sm:$0xff]
      %v829 = vld [vmem:[%s769 + $0x79] sm:$0xff]
      %v830 = vld [vmem:[%s769 + $0x81] sm:$0xff]
      %v831 = vld [vmem:[%s769 + $0x91] sm:$0xff]
      %v832 = vld [vmem:[%s769 + $0x99] sm:$0xff]
      %v833 = vld [vmem:[%s769 + $0xa9] sm:$0xff]
      %v834 = vld [vmem:[%s769 + $0xb1] sm:$0xff]
      %v835 = vperm.slane %v620, 4
      %v836 = vmul.f32 %v819, %v835
      %v837 = vmul.f32 %v820, %v835
      %v838 = vmul.f32 %v821, %v835
      %v839 = vmul.f32 %v822, %v835
      %v840 = vmul.f32 %v823, %v835
      %v841 = vmul.f32 %v824, %v835
      %v842 = vmul.f32 %v825, %v835
      %v843 = vmul.f32 %v826, %v835
      %v844 = vmul.f32 %v827, %v835
      %v845 = vmul.f32 %v828, %v835
      %v846 = vmul.f32 %v829, %v835
      %v847 = vmul.f32 %v830, %v835
      %v848 = vmul.f32 %v831, %v835
      %v849 = vmul.f32 %v832, %v835
      %v850 = vmul.f32 %v833, %v835
      %v851 = vmul.f32 %v834, %v835
      %v852 = vadd.f32 %v803, %v836
      %v853 = vadd.f32 %v804, %v837
      %v854 = vadd.f32 %v805, %v838
      %v855 = vadd.f32 %v806, %v839
      %v856 = vadd.f32 %v807, %v840
      %v857 = vadd.f32 %v808, %v841
      %v858 = vadd.f32 %v809, %v842
      %v859 = vadd.f32 %v810, %v843
      %v860 = vadd.f32 %v811, %v844
      %v861 = vadd.f32 %v812, %v845
      %v862 = vadd.f32 %v813, %v846
      %v863 = vadd.f32 %v814, %v847
      %v864 = vadd.f32 %v815, %v848
      %v865 = vadd.f32 %v816, %v849
      %v866 = vadd.f32 %v817, %v850
      %v867 = vadd.f32 %v818, %v851
      %v868 = vld [vmem:[%s769 + $0x2] sm:$0xff]
      %v869 = vld [vmem:[%s769 + $0xa] sm:$0xff]
      %v870 = vld [vmem:[%s769 + $0x1a] sm:$0xff]
      %v871 = vld [vmem:[%s769 + $0x22] sm:$0xff]
      %v872 = vld [vmem:[%s769 + $0x32] sm:$0xff]
      %v873 = vld [vmem:[%s769 + $0x3a] sm:$0xff]
      %v874 = vld [vmem:[%s769 + $0x4a] sm:$0xff]
      %v875 = vld [vmem:[%s769 + $0x52] sm:$0xff]
      %v876 = vld [vmem:[%s769 + $0x62] sm:$0xff]
      %v877 = vld [vmem:[%s769 + $0x6a] sm:$0xff]
      %v878 = vld [vmem:[%s769 + $0x7a] sm:$0xff]
      %v879 = vld [vmem:[%s769 + $0x82] sm:$0xff]
      %v880 = vld [vmem:[%s769 + $0x92] sm:$0xff]
      %v881 = vld [vmem:[%s769 + $0x9a] sm:$0xff]
      %v882 = vld [vmem:[%s769 + $0xaa] sm:$0xff]
      %v883 = vld [vmem:[%s769 + $0xb2] sm:$0xff]
      %v884 = vperm.slane %v620, 5
      %v885 = vmul.f32 %v868, %v884
      %v886 = vmul.f32 %v869, %v884
      %v887 = vmul.f32 %v870, %v884
      %v888 = vmul.f32 %v871, %v884
      %v889 = vmul.f32 %v872, %v884
      %v890 = vmul.f32 %v873, %v884
      %v891 = vmul.f32 %v874, %v884
      %v892 = vmul.f32 %v875, %v884
      %v893 = vmul.f32 %v876, %v884
      %v894 = vmul.f32 %v877, %v884
      %v895 = vmul.f32 %v878, %v884
      %v896 = vmul.f32 %v879, %v884
      %v897 = vmul.f32 %v880, %v884
      %v898 = vmul.f32 %v881, %v884
      %v899 = vmul.f32 %v882, %v884
      %v900 = vmul.f32 %v883, %v884
      %v901 = vadd.f32 %v852, %v885
      %v902 = vadd.f32 %v853, %v886
      %v903 = vadd.f32 %v854, %v887
      %v904 = vadd.f32 %v855, %v888
      %v905 = vadd.f32 %v856, %v889
      %v906 = vadd.f32 %v857, %v890
      %v907 = vadd.f32 %v858, %v891
      %v908 = vadd.f32 %v859, %v892
      %v909 = vadd.f32 %v860, %v893
      %v910 = vadd.f32 %v861, %v894
      %v911 = vadd.f32 %v862, %v895
      %v912 = vadd.f32 %v863, %v896
      %v913 = vadd.f32 %v864, %v897
      %v914 = vadd.f32 %v865, %v898
      %v915 = vadd.f32 %v866, %v899
      %v916 = vadd.f32 %v867, %v900
      %s917 = scalar_lea.vmem [#allocation2], 48
      %v918 = vld [vmem:[%s917] sm:$0xff]
      %v919 = vld [vmem:[%s917 + $0x8] sm:$0xff]
      %v920 = vld [vmem:[%s917 + $0x18] sm:$0xff]
      %v921 = vld [vmem:[%s917 + $0x20] sm:$0xff]
      %v922 = vld [vmem:[%s917 + $0x30] sm:$0xff]
      %v923 = vld [vmem:[%s917 + $0x38] sm:$0xff]
      %v924 = vld [vmem:[%s917 + $0x48] sm:$0xff]
      %v925 = vld [vmem:[%s917 + $0x50] sm:$0xff]
      %v926 = vld [vmem:[%s917 + $0x60] sm:$0xff]
      %v927 = vld [vmem:[%s917 + $0x68] sm:$0xff]
      %v928 = vld [vmem:[%s917 + $0x78] sm:$0xff]
      %v929 = vld [vmem:[%s917 + $0x80] sm:$0xff]
      %v930 = vld [vmem:[%s917 + $0x90] sm:$0xff]
      %v931 = vld [vmem:[%s917 + $0x98] sm:$0xff]
      %v932 = vld [vmem:[%s917 + $0xa8] sm:$0xff]
      %v933 = vld [vmem:[%s917 + $0xb0] sm:$0xff]
      %v934 = vperm.slane %v620, 6
      %v935 = vmul.f32 %v918, %v934
      %v936 = vmul.f32 %v919, %v934
      %v937 = vmul.f32 %v920, %v934
      %v938 = vmul.f32 %v921, %v934
      %v939 = vmul.f32 %v922, %v934
      %v940 = vmul.f32 %v923, %v934
      %v941 = vmul.f32 %v924, %v934
      %v942 = vmul.f32 %v925, %v934
      %v943 = vmul.f32 %v926, %v934
      %v944 = vmul.f32 %v927, %v934
      %v945 = vmul.f32 %v928, %v934
      %v946 = vmul.f32 %v929, %v934
      %v947 = vmul.f32 %v930, %v934
      %v948 = vmul.f32 %v931, %v934
      %v949 = vmul.f32 %v932, %v934
      %v950 = vmul.f32 %v933, %v934
      %v951 = vadd.f32 %v901, %v935
      %v952 = vadd.f32 %v902, %v936
      %v953 = vadd.f32 %v903, %v937
      %v954 = vadd.f32 %v904, %v938
      %v955 = vadd.f32 %v905, %v939
      %v956 = vadd.f32 %v906, %v940
      %v957 = vadd.f32 %v907, %v941
      %v958 = vadd.f32 %v908, %v942
      %v959 = vadd.f32 %v909, %v943
      %v960 = vadd.f32 %v910, %v944
      %v961 = vadd.f32 %v911, %v945
      %v962 = vadd.f32 %v912, %v946
      %v963 = vadd.f32 %v913, %v947
      %v964 = vadd.f32 %v914, %v948
      %v965 = vadd.f32 %v915, %v949
      %v966 = vadd.f32 %v916, %v950
      %v967 = vld [vmem:[%s917 + $0x1] sm:$0xff]
      %v968 = vld [vmem:[%s917 + $0x9] sm:$0xff]
      %v969 = vld [vmem:[%s917 + $0x19] sm:$0xff]
      %v970 = vld [vmem:[%s917 + $0x21] sm:$0xff]
      %v971 = vld [vmem:[%s917 + $0x31] sm:$0xff]
      %v972 = vld [vmem:[%s917 + $0x39] sm:$0xff]
      %v973 = vld [vmem:[%s917 + $0x49] sm:$0xff]
      %v974 = vld [vmem:[%s917 + $0x51] sm:$0xff]
      %v975 = vld [vmem:[%s917 + $0x61] sm:$0xff]
      %v976 = vld [vmem:[%s917 + $0x69] sm:$0xff]
      %v977 = vld [vmem:[%s917 + $0x79] sm:$0xff]
      %v978 = vld [vmem:[%s917 + $0x81] sm:$0xff]
      %v979 = vld [vmem:[%s917 + $0x91] sm:$0xff]
      %v980 = vld [vmem:[%s917 + $0x99] sm:$0xff]
      %v981 = vld [vmem:[%s917 + $0xa9] sm:$0xff]
      %v982 = vld [vmem:[%s917 + $0xb1] sm:$0xff]
      %v983 = vperm.slane %v620, 7
      %v984 = vmul.f32 %v967, %v983
      %v985 = vmul.f32 %v968, %v983
      %v986 = vmul.f32 %v969, %v983
      %v987 = vmul.f32 %v970, %v983
      %v988 = vmul.f32 %v971, %v983
      %v989 = vmul.f32 %v972, %v983
      %v990 = vmul.f32 %v973, %v983
      %v991 = vmul.f32 %v974, %v983
      %v992 = vmul.f32 %v975, %v983
      %v993 = vmul.f32 %v976, %v983
      %v994 = vmul.f32 %v977, %v983
      %v995 = vmul.f32 %v978, %v983
      %v996 = vmul.f32 %v979, %v983
      %v997 = vmul.f32 %v980, %v983
      %v998 = vmul.f32 %v981, %v983
      %v999 = vmul.f32 %v982, %v983
      %v1000 = vadd.f32 %v951, %v984
      %v1001 = vadd.f32 %v952, %v985
      %v1002 = vadd.f32 %v953, %v986
      %v1003 = vadd.f32 %v954, %v987
      %v1004 = vadd.f32 %v955, %v988
      %v1005 = vadd.f32 %v956, %v989
      %v1006 = vadd.f32 %v957, %v990
      %v1007 = vadd.f32 %v958, %v991
      %v1008 = vadd.f32 %v959, %v992
      %v1009 = vadd.f32 %v960, %v993
      %v1010 = vadd.f32 %v961, %v994
      %v1011 = vadd.f32 %v962, %v995
      %v1012 = vadd.f32 %v963, %v996
      %v1013 = vadd.f32 %v964, %v997
      %v1014 = vadd.f32 %v965, %v998
      %v1015 = vadd.f32 %v966, %v999
      %v1016 = vld [vmem:[%s917 + $0x2] sm:$0xff]
      %v1017 = vld [vmem:[%s917 + $0xa] sm:$0xff]
      %v1018 = vld [vmem:[%s917 + $0x1a] sm:$0xff]
      %v1019 = vld [vmem:[%s917 + $0x22] sm:$0xff]
      %v1020 = vld [vmem:[%s917 + $0x32] sm:$0xff]
      %v1021 = vld [vmem:[%s917 + $0x3a] sm:$0xff]
      %v1022 = vld [vmem:[%s917 + $0x4a] sm:$0xff]
      %v1023 = vld [vmem:[%s917 + $0x52] sm:$0xff]
      %v1024 = vld [vmem:[%s917 + $0x62] sm:$0xff]
      %v1025 = vld [vmem:[%s917 + $0x6a] sm:$0xff]
      %v1026 = vld [vmem:[%s917 + $0x7a] sm:$0xff]
      %v1027 = vld [vmem:[%s917 + $0x82] sm:$0xff]
      %v1028 = vld [vmem:[%s917 + $0x92] sm:$0xff]
      %v1029 = vld [vmem:[%s917 + $0x9a] sm:$0xff]
      %v1030 = vld [vmem:[%s917 + $0xaa] sm:$0xff]
      %v1031 = vld [vmem:[%s917 + $0xb2] sm:$0xff]
      %v1032 = vperm.slane %v621, 0
      %v1033 = vmul.f32 %v1016, %v1032
      %v1034 = vmul.f32 %v1017, %v1032
      %v1035 = vmul.f32 %v1018, %v1032
      %v1036 = vmul.f32 %v1019, %v1032
      %v1037 = vmul.f32 %v1020, %v1032
      %v1038 = vmul.f32 %v1021, %v1032
      %v1039 = vmul.f32 %v1022, %v1032
      %v1040 = vmul.f32 %v1023, %v1032
      %v1041 = vmul.f32 %v1024, %v1032
      %v1042 = vmul.f32 %v1025, %v1032
      %v1043 = vmul.f32 %v1026, %v1032
      %v1044 = vmul.f32 %v1027, %v1032
      %v1045 = vmul.f32 %v1028, %v1032
      %v1046 = vmul.f32 %v1029, %v1032
      %v1047 = vmul.f32 %v1030, %v1032
      %v1048 = vmul.f32 %v1031, %v1032
      %v1049 = vadd.f32 %v1000, %v1033
      %v1050 = vadd.f32 %v1001, %v1034
      %v1051 = vadd.f32 %v1002, %v1035
      %v1052 = vadd.f32 %v1003, %v1036
      %v1053 = vadd.f32 %v1004, %v1037
      %v1054 = vadd.f32 %v1005, %v1038
      %v1055 = vadd.f32 %v1006, %v1039
      %v1056 = vadd.f32 %v1007, %v1040
      %v1057 = vadd.f32 %v1008, %v1041
      %v1058 = vadd.f32 %v1009, %v1042
      %v1059 = vadd.f32 %v1010, %v1043
      %v1060 = vadd.f32 %v1011, %v1044
      %v1061 = vadd.f32 %v1012, %v1045
      %v1062 = vadd.f32 %v1013, %v1046
      %v1063 = vadd.f32 %v1014, %v1047
      %v1064 = vadd.f32 %v1015, %v1048
      %v1065 = vld [vmem:[%s4] sm:$0x1]
      %v1067 = vperm.slane %v1065, 0
      %v1069 = vadd.f32 %v1049, %v1067
      %v1070 = vadd.f32 %v1050, %v1067
      %v1071 = vadd.f32 %v1051, %v1067
      %v1072 = vadd.f32 %v1052, %v1067
      %v1073 = vadd.f32 %v1053, %v1067
      %v1074 = vadd.f32 %v1054, %v1067
      %v1075 = vadd.f32 %v1055, %v1067
      %v1076 = vadd.f32 %v1056, %v1067
      %v1077 = vadd.f32 %v1057, %v1067
      %v1078 = vadd.f32 %v1058, %v1067
      %v1079 = vadd.f32 %v1059, %v1067
      %v1080 = vadd.f32 %v1060, %v1067
      %v1081 = vadd.f32 %v1061, %v1067
      %v1082 = vadd.f32 %v1062, %v1067
      %v1083 = vadd.f32 %v1063, %v1067
      %v1084 = vadd.f32 %v1064, %v1067
      %v1085 = vmax.f32 %v1069, 0.0
      %v1086 = vmax.f32 %v1070, 0.0
      %v1087 = vmax.f32 %v1071, 0.0
      %v1088 = vmax.f32 %v1072, 0.0
      %v1089 = vmax.f32 %v1073, 0.0
      %v1090 = vmax.f32 %v1074, 0.0
      %v1091 = vmax.f32 %v1075, 0.0
      %v1092 = vmax.f32 %v1076, 0.0
      %v1093 = vmax.f32 %v1077, 0.0
      %v1094 = vmax.f32 %v1078, 0.0
      %v1095 = vmax.f32 %v1079, 0.0
      %v1096 = vmax.f32 %v1080, 0.0
      %v1097 = vmax.f32 %v1081, 0.0
      %v1098 = vmax.f32 %v1082, 0.0
      %v1099 = vmax.f32 %v1083, 0.0
      %v1100 = vmax.f32 %v1084, 0.0
      %v1101 = vmin.f32 %v1085, 6.0
      %v1102 = vmin.f32 %v1086, 6.0
      %v1103 = vmin.f32 %v1087, 6.0
      %v1104 = vmin.f32 %v1088, 6.0
      %v1105 = vmin.f32 %v1089, 6.0
      %v1106 = vmin.f32 %v1090, 6.0
      %v1107 = vmin.f32 %v1091, 6.0
      %v1108 = vmin.f32 %v1092, 6.0
      %v1109 = vmin.f32 %v1093, 6.0
      %v1110 = vmin.f32 %v1094, 6.0
      %v1111 = vmin.f32 %v1095, 6.0
      %v1112 = vmin.f32 %v1096, 6.0
      %v1113 = vmin.f32 %v1097, 6.0
      %v1114 = vmin.f32 %v1098, 6.0
      %v1115 = vmin.f32 %v1099, 6.0
      %v1116 = vmin.f32 %v1100, 6.0
      %v1117 = vpack.c.bf16 %v1102, %v1101
      %v1118 = vpack.c.bf16 %v1104, %v1103
      %v1119 = vpack.c.bf16 %v1106, %v1105
      %v1120 = vpack.c.bf16 %v1108, %v1107
      %v1121 = vpack.c.bf16 %v1110, %v1109
      %v1122 = vpack.c.bf16 %v1112, %v1111
      %v1123 = vpack.c.bf16 %v1114, %v1113
      %v1124 = vpack.c.bf16 %v1116, %v1115
      %v1125 = vld [vmem:[%s5] sm:$0xf]
      %v1126 = vld [vmem:[%s5 + $0x4] sm:$0xf]
      %v1127 = vld [vmem:[%s5 + $0x8] sm:$0xf]
      %v1128 = vld [vmem:[%s6] sm:$0x1]
      %v1130 = vperm.slane %v1128, 0
      %v1135 = vunpack.c.l.b16 %v1125
      %v1136 = vunpack.c.l.b16 %v1126
      %v1137 = vunpack.c.l.b16 %v1127
      %v1138 = vpack.c.b16 %v1136, %v1135
      %v1139 = vpack.c.b16 %v1137, %v1137
      %v1142 = vsel %vm552, %v1117, 0
      %v1145 = vsel %vm552, %v1118, 0
      %v1148 = vsel %vm552, %v1119, 0
      %v1151 = vsel %vm552, %v1120, 0
      %v1154 = vsel %vm552, %v1121, 0
      %v1157 = vsel %vm552, %v1122, 0
      %v1160 = vsel %vm552, %v1123, 0
      %v1163 = vsel %vm552, %v1124, 0
      %vm1165 = vcmask 1043456
      %v1167 = vsel %vm1165, %v1139, 0
      %1169 = vmatpush.bf16.msra.mxu0 0
      %1170 = vmatpush.bf16.msra.mxu0 0
      %1171 = vmatpush.bf16.msra.mxu0 0
      %1172 = vmatpush.bf16.msra.mxu0 0
      %1173 = vmatpush.bf16.msra.mxu0 0
      %1174 = vmatpush.bf16.msra.mxu0 0
      %1175 = vmatpush.bf16.msra.mxu0 %v1167
      %1176 = vmatpush.bf16.msra.mxu0 %v1138
      %1177 = vmatmul.bf16.gmra.mxu0 %v1142
      %v1178 = vpop.f32.mrf.mxu0
      %v1179 = vadd.f32 %v1130, %v1178
      %v1180 = vpop.f32.mrf.mxu0
      %v1181 = vadd.f32 %v1130, %v1180
      %1182 = vmatmul.bf16.gmra.mxu0 %v1145
      %v1183 = vpop.f32.mrf.mxu0
      %v1184 = vadd.f32 %v1130, %v1183
      %v1185 = vpop.f32.mrf.mxu0
      %v1186 = vadd.f32 %v1130, %v1185
      %1187 = vmatmul.bf16.gmra.mxu0 %v1148
      %v1188 = vpop.f32.mrf.mxu0
      %v1189 = vadd.f32 %v1130, %v1188
      %v1190 = vpop.f32.mrf.mxu0
      %v1191 = vadd.f32 %v1130, %v1190
      %1192 = vmatmul.bf16.gmra.mxu0 %v1151
      %v1193 = vpop.f32.mrf.mxu0
      %v1194 = vadd.f32 %v1130, %v1193
      %v1195 = vpop.f32.mrf.mxu0
      %v1196 = vadd.f32 %v1130, %v1195
      %1197 = vmatmul.bf16.gmra.mxu0 %v1154
      %v1198 = vpop.f32.mrf.mxu0
      %v1199 = vadd.f32 %v1130, %v1198
      %v1200 = vpop.f32.mrf.mxu0
      %v1201 = vadd.f32 %v1130, %v1200
      %1202 = vmatmul.bf16.gmra.mxu0 %v1157
      %v1203 = vpop.f32.mrf.mxu0
      %v1204 = vadd.f32 %v1130, %v1203
      %v1205 = vpop.f32.mrf.mxu0
      %v1206 = vadd.f32 %v1130, %v1205
      %1207 = vmatmul.bf16.gmra.mxu0 %v1160
      %v1208 = vpop.f32.mrf.mxu0
      %v1209 = vadd.f32 %v1130, %v1208
      %v1210 = vpop.f32.mrf.mxu0
      %v1211 = vadd.f32 %v1130, %v1210
      %1212 = vmatmul.bf16.gmra.mxu0 %v1163
      %v1213 = vpop.f32.mrf.mxu0
      %v1214 = vadd.f32 %v1130, %v1213
      %v1215 = vpop.f32.mrf.mxu0
      %v1216 = vadd.f32 %v1130, %v1215
      %1217 = vdwg.mxu0
      %s1218 = sadd.s32 %s305, 1
      %s1219 = smul.u32 %s1218, 24
      %s1220 = scalar_lea.vmem %s292, %s1219
      %v1221 = vld [vmem:[%s1220 + $0x1] sm:$0xff]
      %v1222 = vld [vmem:[%s1220 + $0x9] sm:$0xff]
      %v1223 = vld [vmem:[%s1220 + $0x19] sm:$0xff]
      %v1224 = vld [vmem:[%s1220 + $0x21] sm:$0xff]
      %v1225 = vld [vmem:[%s1220 + $0x31] sm:$0xff]
      %v1226 = vld [vmem:[%s1220 + $0x39] sm:$0xff]
      %v1227 = vld [vmem:[%s1220 + $0x49] sm:$0xff]
      %v1228 = vld [vmem:[%s1220 + $0x51] sm:$0xff]
      %v1229 = vld [vmem:[%s1220 + $0x61] sm:$0xff]
      %v1230 = vld [vmem:[%s1220 + $0x69] sm:$0xff]
      %v1231 = vld [vmem:[%s1220 + $0x79] sm:$0xff]
      %v1232 = vld [vmem:[%s1220 + $0x81] sm:$0xff]
      %v1233 = vld [vmem:[%s1220 + $0x91] sm:$0xff]
      %v1234 = vld [vmem:[%s1220 + $0x99] sm:$0xff]
      %v1235 = vld [vmem:[%s1220 + $0xa9] sm:$0xff]
      %v1236 = vld [vmem:[%s1220 + $0xb1] sm:$0xff]
      %v1237 = vadd.f32 %v1179, %v1221
      %v1238 = vadd.f32 %v1181, %v1222
      %v1239 = vadd.f32 %v1184, %v1223
      %v1240 = vadd.f32 %v1186, %v1224
      %v1241 = vadd.f32 %v1189, %v1225
      %v1242 = vadd.f32 %v1191, %v1226
      %v1243 = vadd.f32 %v1194, %v1227
      %v1244 = vadd.f32 %v1196, %v1228
      %v1245 = vadd.f32 %v1199, %v1229
      %v1246 = vadd.f32 %v1201, %v1230
      %v1247 = vadd.f32 %v1204, %v1231
      %v1248 = vadd.f32 %v1206, %v1232
      %v1249 = vadd.f32 %v1209, %v1233
      %v1250 = vadd.f32 %v1211, %v1234
      %v1251 = vadd.f32 %v1214, %v1235
      %v1252 = vadd.f32 %v1216, %v1236
      %1253 = vst.msk [vmem:[%s302] sm:$0xff] %vm358, %v1237
      %1254 = vst.msk [vmem:[%s302 + $0x8] sm:$0xff] %vm358, %v1238
      %1255 = vst.msk [vmem:[%s302 + $0x10] sm:$0xff] %vm358, %v1239
      %1256 = vst.msk [vmem:[%s302 + $0x18] sm:$0xff] %vm358, %v1240
      %1257 = vst.msk [vmem:[%s302 + $0x20] sm:$0xff] %vm358, %v1241
      %1258 = vst.msk [vmem:[%s302 + $0x28] sm:$0xff] %vm358, %v1242
      %1259 = vst.msk [vmem:[%s302 + $0x30] sm:$0xff] %vm358, %v1243
      %1260 = vst.msk [vmem:[%s302 + $0x38] sm:$0xff] %vm358, %v1244
      %1261 = vst.msk [vmem:[%s302 + $0x40] sm:$0xff] %vm358, %v1245
      %1262 = vst.msk [vmem:[%s302 + $0x48] sm:$0xff] %vm358, %v1246
      %1263 = vst.msk [vmem:[%s302 + $0x50] sm:$0xff] %vm358, %v1247
      %1264 = vst.msk [vmem:[%s302 + $0x58] sm:$0xff] %vm358, %v1248
      %1265 = vst.msk [vmem:[%s302 + $0x60] sm:$0xff] %vm358, %v1249
      %1266 = vst.msk [vmem:[%s302 + $0x68] sm:$0xff] %vm358, %v1250
      %1267 = vst.msk [vmem:[%s302 + $0x70] sm:$0xff] %vm358, %v1251
      %1268 = vst.msk [vmem:[%s302 + $0x78] sm:$0xff] %vm358, %v1252
      %s1269 = smul.u32 8, %s23
      %p1270 = scmp.lt.s32.totalorder %s22, 1
      %s1271 = scalar_select %p1270, %s22, 1
      %p1272 = scmp.lt.s32.totalorder %s1269, 15
      %s1273 = scalar_select %p1272, %s1269, 15
      %s1274 = smul.addr %s1273, 2
      %s1275 = smul.addr %s1271, 32
      %s1276 = sadd.s32 %s1274, %s1275
      %s1277 = smul.addr %s1276, 8
      %s1278 = scalar_lea.vmem %s7, %s1277
      // Predicated region
      $region57: #{invert_residual_forward.1} parent=47 // pred_check
        %p1279 = pneg %p202
      $region58: #{invert_residual_forward.1} parent=47 // pred_check_branch
        %1281 = sbr.rel (%p1279) target = $region60
      $region59: #{invert_residual_forward.1} parent=47 // pred_region
        %s1282 = smul.u32 8, %s23
      $region60: #{invert_residual_forward.1} parent=47 // pred_fallthru
        _
    $region48: #{invert_residual_forward.1} parent=5 // pred_fallthru
      _
    %p1283 = scmp.le.s32.totalorder 2, %s13
    // Predicated region
    $region61: #{invert_residual_forward.1} parent=5 // pred_check
      %p1284 = pneg %p1283
    $region62: #{invert_residual_forward.1} parent=5 // pred_check_branch
      %1286 = sbr.rel (%p1284) target = $region64
    $region63: #{invert_residual_forward.1} parent=5 // pred_region
      %s1287 = ssub.s32 %s13, 2
      // Predicated region
      $region65: #{invert_residual_forward.1} parent=63 // pred_check
        %p1288 = pneg %p208
      $region66: #{invert_residual_forward.1} parent=63 // pred_check_branch
        %1290 = sbr.rel (%p1288) target = $region68
      $region67: #{invert_residual_forward.1} parent=63 // pred_region
        %s1291 = smul.u32 8, %s25
        %p1292 = scmp.lt.s32.totalorder %s24, 1
        %s1293 = scalar_select %p1292, %s24, 1
        %p1294 = scmp.lt.s32.totalorder %s1291, 15
        %s1295 = scalar_select %p1294, %s1291, 15
        %s1296 = smul.addr %s1295, 2
        %s1297 = smul.addr %s1293, 32
        %s1298 = sadd.s32 %s1296, %s1297
        %s1299 = smul.addr %s1298, 8
        %s1300 = scalar_lea.vmem %s7, %s1299
      $region68: #{invert_residual_forward.1} parent=63 // pred_fallthru
        _
    $region64: #{invert_residual_forward.1} parent=5 // pred_fallthru
      _
  $region6: #{invert_residual_forward.1} parent=0 // loop_footer
    %s17 = sadd.s32 1, %s13
  $region7: #{invert_residual_forward.1} parent=0 // loop_footer_branch
    %12 = sbr.rel target = $region3
  $region8: #{invert_residual_forward.1} parent=0 // loop_exit
    _

</llo_original>
